<compile_context>
chip_gen: v7x
topology: tpu7x:2x2x1
jax: 0.10.0
libtpu: 0.0.40
codegen_flags: <defaults>
</compile_context>

<pallas_src>
import math

import jax
import jax.numpy as jnp
from jax.experimental import pallas as pl
from jax.experimental.pallas import tpu as pltpu

# ----------------------------- config (small, synthetic) -----------------------------
VOCAB = 128
HIDDEN = 32
N_LAYERS = 2
N_HEADS = 4
HEAD_DIM = HIDDEN // N_HEADS
INTERMEDIATE = 64
MAX_POS = 64
TYPE_VOCAB = 2
NUM_LABELS = 8
LN_EPS = 1e-12
B, S = 2, 8  # batch, sequence
ATT_SCALE = 1.0 / math.sqrt(HEAD_DIM)

MXU_DTYPE = jnp.bfloat16  # matmul operand dtype; accumulation stays f32


# ----------------------------------- kernel helpers ----------------------------------
def _layernorm(h, gamma, beta):
    mean = jnp.mean(h, axis=-1, keepdims=True)
    var = jnp.mean(jnp.square(h - mean), axis=-1, keepdims=True)
    return (h - mean) * jax.lax.rsqrt(var + LN_EPS) * gamma + beta


def _gelu(x):
    # tanh-approx GELU; TODO(synk): exact erf-GELU to match HF hidden_act='gelu' bit-for-bit
    return 0.5 * x * (1.0 + jnp.tanh(0.7978845608028654 * (x + 0.044715 * x * x * x)))


# ----------------------------------- Pallas kernels ----------------------------------
def _emb_ln_kernel(x_ref, g_ref, b_ref, o_ref):
    o_ref[...] = _layernorm(x_ref[...], g_ref[...], b_ref[...]).astype(o_ref.dtype)


def _encoder_layer_kernel(x_ref, mask_ref,
                          wqkv_ref, bqkv_ref, wo_ref, bo_ref, ln1g_ref, ln1b_ref,
                          wi_ref, bi_ref, wf_ref, bf_ref, ln2g_ref, ln2b_ref,
                          o_ref):
    """Whole BERT encoder layer for one batch element: [S, H] in -> [S, H] out."""
    x = x_ref[...]                                   # [S, H]  f32
    mask = mask_ref[...]                             # [1, S]  additive f32 (0 / -10000)

    # --- fused QKV projection: one [H, 3H] matmul ---
    qkv = jnp.dot(x.astype(MXU_DTYPE), wqkv_ref[...],
                  preferred_element_type=jnp.float32) + bqkv_ref[...]      # [S, 3H] f32

    # --- multi-head self-attention (static head loop; nothing leaves VMEM) ---
    ctx_heads = []
    for h in range(N_HEADS):
        lo = h * HEAD_DIM
        qh = qkv[:, lo:lo + HEAD_DIM].astype(MXU_DTYPE)                         # [S, Dh]
        kh = qkv[:, HIDDEN + lo:HIDDEN + lo + HEAD_DIM].astype(MXU_DTYPE)       # [S, Dh]
        vh = qkv[:, 2 * HIDDEN + lo:2 * HIDDEN + lo + HEAD_DIM].astype(MXU_DTYPE)
        # q @ k^T via dot_general contracting on Dh (MXU takes the transposed operand;
        # no XLU transpose).
        s = jax.lax.dot_general(qh, kh, (((1,), (1,)), ((), ())),
                                preferred_element_type=jnp.float32)             # [S, S]
        s = s * ATT_SCALE + mask
        s = s - jnp.max(s, axis=-1, keepdims=True)
        p = jnp.exp(s)
        p = p * pl.reciprocal(jnp.sum(p, axis=-1, keepdims=True), approx=True)
        ctx_heads.append(jnp.dot(p.astype(MXU_DTYPE), vh,
                                 preferred_element_type=jnp.float32))           # [S, Dh]
    # heads folded onto the lane axis -> lane-dense [S, H]; no transpose, no HBM round-trip
    ctx = jnp.concatenate(ctx_heads, axis=-1)

    # --- attention output projection + residual + LayerNorm ---
    attn = jnp.dot(ctx.astype(MXU_DTYPE), wo_ref[...],
                   preferred_element_type=jnp.float32) + bo_ref[...]
    h1 = _layernorm(attn + x, ln1g_ref[...], ln1b_ref[...])

    # --- FFN (matmul + GELU + matmul) + residual + LayerNorm; intermediate stays in VMEM ---
    f = jnp.dot(h1.astype(MXU_DTYPE), wi_ref[...],
                preferred_element_type=jnp.float32) + bi_ref[...]
    f = _gelu(f)
    f = jnp.dot(f.astype(MXU_DTYPE), wf_ref[...],
                preferred_element_type=jnp.float32) + bf_ref[...]
    o_ref[...] = _layernorm(f + h1, ln2g_ref[...], ln2b_ref[...]).astype(o_ref.dtype)


# ----------------------------------- kernel wrappers ----------------------------------
def embeddings_layernorm(x, gamma, beta):
    # x: [B*S, H]; one grid step per batch element so both v7x TensorCores get work.
    M, H = x.shape
    return pl.pallas_call(
        _emb_ln_kernel,
        out_shape=jax.ShapeDtypeStruct((M, H), jnp.float32),
        grid=(B,),
        in_specs=[pl.BlockSpec((S, H), lambda i: (i, 0)),
                  pl.BlockSpec((1, H), lambda i: (0, 0)),
                  pl.BlockSpec((1, H), lambda i: (0, 0))],
        out_specs=pl.BlockSpec((S, H), lambda i: (i, 0)),
        compiler_params=pltpu.CompilerParams(dimension_semantics=("parallel",)),
    )(x, gamma, beta)


def encoder_layer(x, ext_mask, p):
    # x: [B, S, H] f32; ext_mask: [B, 1, S] additive f32.
    def w_spec(shape):
        return pl.BlockSpec(shape, lambda b: (0, 0))   # weights resident across the grid

    seq_spec = pl.BlockSpec((pl.Squeezed(), S, HIDDEN), lambda b: (b, 0, 0))
    return pl.pallas_call(
        _encoder_layer_kernel,
        out_shape=jax.ShapeDtypeStruct((B, S, HIDDEN), jnp.float32),
        grid=(B,),
        in_specs=[
            seq_spec,                                               # x
            pl.BlockSpec((pl.Squeezed(), 1, S), lambda b: (b, 0, 0)),  # mask
            w_spec((HIDDEN, 3 * HIDDEN)), w_spec((1, 3 * HIDDEN)),  # wqkv, bqkv
            w_spec((HIDDEN, HIDDEN)), w_spec((1, HIDDEN)),          # wo, bo
            w_spec((1, HIDDEN)), w_spec((1, HIDDEN)),               # ln1 g/b
            w_spec((HIDDEN, INTERMEDIATE)), w_spec((1, INTERMEDIATE)),  # wi, bi
            w_spec((INTERMEDIATE, HIDDEN)), w_spec((1, HIDDEN)),    # wf, bf
            w_spec((1, HIDDEN)), w_spec((1, HIDDEN)),               # ln2 g/b
        ],
        out_specs=seq_spec,
        compiler_params=pltpu.CompilerParams(dimension_semantics=("parallel",)),
    )(x, ext_mask,
      p["wqkv"], p["bqkv"], p["wo"], p["bo"], p["ln1_g"], p["ln1_b"],
      p["wi"], p["bi"], p["wf"], p["bf"], p["ln2_g"], p["ln2_b"])


# --------------------------------- model (JAX glue) -----------------------------------
def init_params(key):
    def normal(key, shape, dtype=jnp.float32):
        return (0.02 * jax.random.normal(key, shape, dtype=jnp.float32)).astype(dtype)

    keys = iter(jax.random.split(key, 4 + 6 * N_LAYERS))
    params = {
        "word_emb": normal(next(keys), (VOCAB, HIDDEN)),
        "pos_emb": normal(next(keys), (MAX_POS, HIDDEN)),
        "type_emb": normal(next(keys), (TYPE_VOCAB, HIDDEN)),
        "emb_ln_g": jnp.ones((1, HIDDEN), jnp.float32),
        "emb_ln_b": jnp.zeros((1, HIDDEN), jnp.float32),
        "cls_w": normal(next(keys), (HIDDEN, NUM_LABELS)),
        "cls_b": jnp.zeros((NUM_LABELS,), jnp.float32),
        "layers": [],
    }
    for _ in range(N_LAYERS):
        wq = normal(next(keys), (HIDDEN, HIDDEN))
        wk = normal(next(keys), (HIDDEN, HIDDEN))
        wv = normal(next(keys), (HIDDEN, HIDDEN))
        layer = {
            # fused QKV weight packed [H, 3H] = (q | k | v), stored bf16 in HBM
            "wqkv": jnp.concatenate([wq, wk, wv], axis=1).astype(MXU_DTYPE),
            "bqkv": jnp.zeros((1, 3 * HIDDEN), jnp.float32),
            "wo": normal(next(keys), (HIDDEN, HIDDEN), MXU_DTYPE),
            "bo": jnp.zeros((1, HIDDEN), jnp.float32),
            "wi": normal(next(keys), (HIDDEN, INTERMEDIATE), MXU_DTYPE),
            "bi": jnp.zeros((1, INTERMEDIATE), jnp.float32),
            "wf": normal(next(keys), (INTERMEDIATE, HIDDEN), MXU_DTYPE),
            "bf": jnp.zeros((1, HIDDEN), jnp.float32),
            "ln1_g": jnp.ones((1, HIDDEN), jnp.float32),
            "ln1_b": jnp.zeros((1, HIDDEN), jnp.float32),
            "ln2_g": jnp.ones((1, HIDDEN), jnp.float32),
            "ln2_b": jnp.zeros((1, HIDDEN), jnp.float32),
        }
        params["layers"].append(layer)
    return params


@jax.jit
def bert_forward(params, input_ids, attention_mask, position_ids):
    # BertEmbeddings: word + position + token_type(=0) embeddings, then LayerNorm
    # (dropout is an eval-time no-op). Embedding-table gathers stay in XLA.
    emb = (params["word_emb"][input_ids]
           + params["pos_emb"][position_ids]
           + params["type_emb"][0])
    x = embeddings_layernorm(emb.reshape(B * S, HIDDEN),
                             params["emb_ln_g"], params["emb_ln_b"])
    x = x.reshape(B, S, HIDDEN)

    # extended additive attention mask: [B, 1, S] with 0 for tokens, -10000 for padding
    ext_mask = ((1.0 - attention_mask.astype(jnp.float32)) * -10000.0).reshape(B, 1, S)

    for layer in params["layers"]:
        x = encoder_layer(x, ext_mask, layer)

    sequence_output = x                                           # [B, S, H] last_hidden_state
    # classifier dropout is an eval no-op; the NUM_LABELS=8-lane classifier matmul stays in
    # XLA per the perf review (a pallas_call here is launch overhead + masked partial stores).
    logits = (jnp.dot(x.reshape(B * S, HIDDEN), params["cls_w"])
              + params["cls_b"]).reshape(B, S, NUM_LABELS)
    # (labels=None, return_dict falsy) -> (logits, sequence_output); loss path not needed
    return logits, sequence_output


if __name__ == "__main__":
    key = jax.random.PRNGKey(0)
    pkey, idkey = jax.random.split(key)
    params = init_params(pkey)

    input_ids = jax.random.randint(idkey, (B, S), 0, VOCAB, dtype=jnp.int32)
    attention_mask = jnp.concatenate(
        [jnp.ones((B, S - 2), jnp.int32), jnp.zeros((B, 2), jnp.int32)], axis=1
    )  # last two tokens are padding
    position_ids = jnp.broadcast_to(jnp.arange(S, dtype=jnp.int32), (B, S))

    logits, seq_out = bert_forward(params, input_ids, attention_mask, position_ids)
    logits = jax.block_until_ready(logits)
    seq_out = jax.block_until_ready(seq_out)
    assert logits.shape == (B, S, NUM_LABELS)
    assert seq_out.shape == (B, S, HIDDEN)
    assert bool(jnp.all(jnp.isfinite(logits)))
    assert bool(jnp.all(jnp.isfinite(seq_out)))
    print("KERNEL_OK")
</pallas_src>

<mosaic_0001>
module attributes {stable_mosaic.version = 11 : i64} {
  func.func @_emb_ln_kernel(%arg0: i32, %arg1: memref<8x32xf32, #tpu.memory_space<vmem>>, %arg2: memref<1x32xf32, #tpu.memory_space<vmem>>, %arg3: memref<1x32xf32, #tpu.memory_space<vmem>>, %arg4: memref<8x32xf32, #tpu.memory_space<vmem>>) attributes {dimension_semantics = [#tpu.dimension_semantics<parallel>], iteration_bounds = array<i64: 2>, scalar_prefetch = 0 : i64, scratch_operands = 0 : i64, tpu.core_type = #tpu.core_type<tc>, window_params = [{transform_indices = @transform_0, window_bounds = array<i64: 8, 32>}, {pipeline_mode = #tpu.pipeline_mode<synchronous>, transform_indices = @transform_1, window_bounds = array<i64: 1, 32>}, {pipeline_mode = #tpu.pipeline_mode<synchronous>, transform_indices = @transform_2, window_bounds = array<i64: 1, 32>}, {transform_indices = @transform_3, window_bounds = array<i64: 8, 32>}]} {
    %c0 = arith.constant 0 : index
    %c0_0 = arith.constant 0 : index
    %0 = vector.load %arg1[%c0, %c0_0] : memref<8x32xf32, #tpu.memory_space<vmem>>, vector<8x32xf32>
    %c0_1 = arith.constant 0 : index
    %c0_2 = arith.constant 0 : index
    %1 = vector.load %arg2[%c0_1, %c0_2] : memref<1x32xf32, #tpu.memory_space<vmem>>, vector<1x32xf32>
    %c0_3 = arith.constant 0 : index
    %c0_4 = arith.constant 0 : index
    %2 = vector.load %arg3[%c0_3, %c0_4] : memref<1x32xf32, #tpu.memory_space<vmem>>, vector<1x32xf32>
    %cst = arith.constant dense<0.000000e+00> : vector<8xf32>
    %3 = vector.multi_reduction <add>, %0, %cst [1] : vector<8x32xf32> to vector<8xf32>
    %4 = vector.shape_cast %3 : vector<8xf32> to vector<8x1xf32>
    %cst_5 = arith.constant 3.200000e+01 : f32
    %5 = vector.broadcast %cst_5 : f32 to vector<8x1xf32>
    %6 = arith.divf %4, %5 : vector<8x1xf32>
    %7 = vector.broadcast %6 : vector<8x1xf32> to vector<8x32xf32>
    %8 = arith.subf %0, %7 : vector<8x32xf32>
    %9 = arith.mulf %8, %8 : vector<8x32xf32>
    %cst_6 = arith.constant dense<0.000000e+00> : vector<8xf32>
    %10 = vector.multi_reduction <add>, %9, %cst_6 [1] : vector<8x32xf32> to vector<8xf32>
    %11 = vector.shape_cast %10 : vector<8xf32> to vector<8x1xf32>
    %cst_7 = arith.constant 3.200000e+01 : f32
    %12 = vector.broadcast %cst_7 : f32 to vector<8x1xf32>
    %13 = arith.divf %11, %12 : vector<8x1xf32>
    %14 = vector.broadcast %6 : vector<8x1xf32> to vector<8x32xf32>
    %15 = arith.subf %0, %14 : vector<8x32xf32>
    %cst_8 = arith.constant 9.99999996E-13 : f32
    %16 = vector.broadcast %cst_8 : f32 to vector<8x1xf32>
    %17 = arith.addf %13, %16 : vector<8x1xf32>
    %18 = math.rsqrt %17 : vector<8x1xf32>
    %19 = vector.broadcast %18 : vector<8x1xf32> to vector<8x32xf32>
    %20 = arith.mulf %15, %19 : vector<8x32xf32>
    %21 = vector.broadcast %1 : vector<1x32xf32> to vector<8x32xf32>
    %22 = arith.mulf %20, %21 : vector<8x32xf32>
    %23 = vector.broadcast %2 : vector<1x32xf32> to vector<8x32xf32>
    %24 = arith.addf %22, %23 : vector<8x32xf32>
    %c0_9 = arith.constant 0 : index
    %c0_10 = arith.constant 0 : index
    %25 = vector.load %arg4[%c0_9, %c0_10] : memref<8x32xf32, #tpu.memory_space<vmem>>, vector<8x32xf32>
    tpu.vector_store %arg4[%c0_9, %c0_10], %24 {strides = array<i32>} : memref<8x32xf32, #tpu.memory_space<vmem>>, vector<8x32xf32>,
    return
  }
  func.func @transform_0(%arg0: i32) -> (i32, i32) {
    %c0_i32 = arith.constant 0 : i32
    %c0_i32_0 = arith.constant 0 : i32
    return %arg0, %c0_i32 : i32, i32
  }
  func.func @transform_1(%arg0: i32) -> (i32, i32) {
    %c0_i32 = arith.constant 0 : i32
    %c0_i32_0 = arith.constant 0 : i32
    %c0_i32_1 = arith.constant 0 : i32
    return %c0_i32, %c0_i32_0 : i32, i32
  }
  func.func @transform_2(%arg0: i32) -> (i32, i32) {
    %c0_i32 = arith.constant 0 : i32
    %c0_i32_0 = arith.constant 0 : i32
    %c0_i32_1 = arith.constant 0 : i32
    return %c0_i32, %c0_i32_0 : i32, i32
  }
  func.func @transform_3(%arg0: i32) -> (i32, i32) {
    %c0_i32 = arith.constant 0 : i32
    %c0_i32_0 = arith.constant 0 : i32
    return %arg0, %c0_i32 : i32, i32
  }
}

module attributes {stable_mosaic.version = 11 : i64} {
  func.func @_encoder_layer_kernel(%arg0: i32, %arg1: memref<1x8x32xf32, #tpu.memory_space<vmem>>, %arg2: memref<1x1x8xf32, #tpu.memory_space<vmem>>, %arg3: memref<32x96xbf16, #tpu.memory_space<vmem>>, %arg4: memref<1x96xf32, #tpu.memory_space<vmem>>, %arg5: memref<32x32xbf16, #tpu.memory_space<vmem>>, %arg6: memref<1x32xf32, #tpu.memory_space<vmem>>, %arg7: memref<1x32xf32, #tpu.memory_space<vmem>>, %arg8: memref<1x32xf32, #tpu.memory_space<vmem>>, %arg9: memref<32x64xbf16, #tpu.memory_space<vmem>>, %arg10: memref<1x64xf32, #tpu.memory_space<vmem>>, %arg11: memref<64x32xbf16, #tpu.memory_space<vmem>>, %arg12: memref<1x32xf32, #tpu.memory_space<vmem>>, %arg13: memref<1x32xf32, #tpu.memory_space<vmem>>, %arg14: memref<1x32xf32, #tpu.memory_space<vmem>>, %arg15: memref<1x8x32xf32, #tpu.memory_space<vmem>>) attributes {dimension_semantics = [#tpu.dimension_semantics<parallel>], iteration_bounds = array<i64: 2>, scalar_prefetch = 0 : i64, scratch_operands = 0 : i64, tpu.core_type = #tpu.core_type<tc>, window_params = [{transform_indices = @transform_0, window_bounds = array<i64: 1, 8, 32>}, {transform_indices = @transform_1, window_bounds = array<i64: 1, 1, 8>}, {pipeline_mode = #tpu.pipeline_mode<synchronous>, transform_indices = @transform_2, window_bounds = array<i64: 32, 96>}, {pipeline_mode = #tpu.pipeline_mode<synchronous>, transform_indices = @transform_3, window_bounds = array<i64: 1, 96>}, {pipeline_mode = #tpu.pipeline_mode<synchronous>, transform_indices = @transform_4, window_bounds = array<i64: 32, 32>}, {pipeline_mode = #tpu.pipeline_mode<synchronous>, transform_indices = @transform_5, window_bounds = array<i64: 1, 32>}, {pipeline_mode = #tpu.pipeline_mode<synchronous>, transform_indices = @transform_6, window_bounds = array<i64: 1, 32>}, {pipeline_mode = #tpu.pipeline_mode<synchronous>, transform_indices = @transform_7, window_bounds = array<i64: 1, 32>}, {pipeline_mode = #tpu.pipeline_mode<synchronous>, transform_indices = @transform_8, window_bounds = array<i64: 32, 64>}, {pipeline_mode = #tpu.pipeline_mode<synchronous>, transform_indices = @transform_9, window_bounds = array<i64: 1, 64>}, {pipeline_mode = #tpu.pipeline_mode<synchronous>, transform_indices = @transform_10, window_bounds = array<i64: 64, 32>}, {pipeline_mode = #tpu.pipeline_mode<synchronous>, transform_indices = @transform_11, window_bounds = array<i64: 1, 32>}, {pipeline_mode = #tpu.pipeline_mode<synchronous>, transform_indices = @transform_12, window_bounds = array<i64: 1, 32>}, {pipeline_mode = #tpu.pipeline_mode<synchronous>, transform_indices = @transform_13, window_bounds = array<i64: 1, 32>}, {transform_indices = @transform_14, window_bounds = array<i64: 1, 8, 32>}]} {
    %c0 = arith.constant 0 : index
    %c0_0 = arith.constant 0 : index
    %c0_1 = arith.constant 0 : index
    %0 = vector.load %arg1[%c0, %c0_0, %c0_1] : memref<1x8x32xf32, #tpu.memory_space<vmem>>, vector<1x8x32xf32>
    %1 = vector.shape_cast %0 : vector<1x8x32xf32> to vector<8x32xf32>
    %c0_2 = arith.constant 0 : index
    %c0_3 = arith.constant 0 : index
    %c0_4 = arith.constant 0 : index
    %2 = vector.load %arg2[%c0_2, %c0_3, %c0_4] : memref<1x1x8xf32, #tpu.memory_space<vmem>>, vector<1x1x8xf32>
    %3 = vector.shape_cast %2 : vector<1x1x8xf32> to vector<1x8xf32>
    %4 = arith.truncf %1 : vector<8x32xf32> to vector<8x32xbf16>
    %c0_5 = arith.constant 0 : index
    %c0_6 = arith.constant 0 : index
    %5 = vector.load %arg3[%c0_5, %c0_6] : memref<32x96xbf16, #tpu.memory_space<vmem>>, vector<32x96xbf16>
    %cst = arith.constant dense<0.000000e+00> : vector<8x96xf32>
    %6 = tpu.matmul %4, %5, %cst {dimension_numbers = #tpu.dot_dimension_numbers<[1], [0], [0], [1], [0, 0, 1, 1], [], []>} : vector<8x32xbf16>, vector<32x96xbf16>, vector<8x96xf32> -> vector<8x96xf32>
    %c0_7 = arith.constant 0 : index
    %c0_8 = arith.constant 0 : index
    %7 = vector.load %arg4[%c0_7, %c0_8] : memref<1x96xf32, #tpu.memory_space<vmem>>, vector<1x96xf32>
    %8 = vector.broadcast %7 : vector<1x96xf32> to vector<8x96xf32>
    %9 = arith.addf %6, %8 : vector<8x96xf32>
    %10 = vector.extract_strided_slice %9 {offsets = [0, 0], sizes = [8, 8], strides = [1, 1]} : vector<8x96xf32> to vector<8x8xf32>
    %11 = arith.truncf %10 : vector<8x8xf32> to vector<8x8xbf16>
    %12 = vector.extract_strided_slice %9 {offsets = [0, 32], sizes = [8, 8], strides = [1, 1]} : vector<8x96xf32> to vector<8x8xf32>
    %13 = arith.truncf %12 : vector<8x8xf32> to vector<8x8xbf16>
    %14 = vector.extract_strided_slice %9 {offsets = [0, 64], sizes = [8, 8], strides = [1, 1]} : vector<8x96xf32> to vector<8x8xf32>
    %15 = arith.truncf %14 : vector<8x8xf32> to vector<8x8xbf16>
    %cst_9 = arith.constant dense<0.000000e+00> : vector<8x8xf32>
    %16 = tpu.matmul %11, %13, %cst_9 {dimension_numbers = #tpu.dot_dimension_numbers<[1], [1], [0], [0], [0, 0, 1, 0], [], []>} : vector<8x8xbf16>, vector<8x8xbf16>, vector<8x8xf32> -> vector<8x8xf32>
    %cst_10 = arith.constant 0.353553385 : f32
    %17 = vector.broadcast %cst_10 : f32 to vector<8x8xf32>
    %18 = arith.mulf %16, %17 : vector<8x8xf32>
    %19 = vector.broadcast %3 : vector<1x8xf32> to vector<8x8xf32>
    %20 = arith.addf %18, %19 : vector<8x8xf32>
    %cst_11 = arith.constant dense<0xFF800000> : vector<8xf32>
    %21 = vector.multi_reduction <maximumf>, %20, %cst_11 [1] : vector<8x8xf32> to vector<8xf32>
    %22 = vector.shape_cast %21 : vector<8xf32> to vector<8x1xf32>
    %23 = vector.broadcast %22 : vector<8x1xf32> to vector<8x8xf32>
    %24 = arith.subf %20, %23 : vector<8x8xf32>
    %25 = math.exp %24 : vector<8x8xf32>
    %cst_12 = arith.constant dense<0.000000e+00> : vector<8xf32>
    %26 = vector.multi_reduction <add>, %25, %cst_12 [1] : vector<8x8xf32> to vector<8xf32>
    %27 = vector.shape_cast %26 : vector<8xf32> to vector<8x1xf32>
    %28 = tpu.reciprocal %27 {approx = true} : vector<8x1xf32> -> vector<8x1xf32>
    %29 = vector.broadcast %28 : vector<8x1xf32> to vector<8x8xf32>
    %30 = arith.mulf %25, %29 : vector<8x8xf32>
    %31 = arith.truncf %30 : vector<8x8xf32> to vector<8x8xbf16>
    %cst_13 = arith.constant dense<0.000000e+00> : vector<8x8xf32>
    %32 = tpu.matmul %31, %15, %cst_13 {dimension_numbers = #tpu.dot_dimension_numbers<[1], [0], [0], [1], [0, 0, 1, 1], [], []>} : vector<8x8xbf16>, vector<8x8xbf16>, vector<8x8xf32> -> vector<8x8xf32>
    %33 = vector.extract_strided_slice %9 {offsets = [0, 8], sizes = [8, 8], strides = [1, 1]} : vector<8x96xf32> to vector<8x8xf32>
    %34 = arith.truncf %33 : vector<8x8xf32> to vector<8x8xbf16>
    %35 = vector.extract_strided_slice %9 {offsets = [0, 40], sizes = [8, 8], strides = [1, 1]} : vector<8x96xf32> to vector<8x8xf32>
    %36 = arith.truncf %35 : vector<8x8xf32> to vector<8x8xbf16>
    %37 = vector.extract_strided_slice %9 {offsets = [0, 72], sizes = [8, 8], strides = [1, 1]} : vector<8x96xf32> to vector<8x8xf32>
    %38 = arith.truncf %37 : vector<8x8xf32> to vector<8x8xbf16>
    %cst_14 = arith.constant dense<0.000000e+00> : vector<8x8xf32>
    %39 = tpu.matmul %34, %36, %cst_14 {dimension_numbers = #tpu.dot_dimension_numbers<[1], [1], [0], [0], [0, 0, 1, 0], [], []>} : vector<8x8xbf16>, vector<8x8xbf16>, vector<8x8xf32> -> vector<8x8xf32>
    %cst_15 = arith.constant 0.353553385 : f32
    %40 = vector.broadcast %cst_15 : f32 to vector<8x8xf32>
    %41 = arith.mulf %39, %40 : vector<8x8xf32>
    %42 = vector.broadcast %3 : vector<1x8xf32> to vector<8x8xf32>
    %43 = arith.addf %41, %42 : vector<8x8xf32>
    %cst_16 = arith.constant dense<0xFF800000> : vector<8xf32>
    %44 = vector.multi_reduction <maximumf>, %43, %cst_16 [1] : vector<8x8xf32> to vector<8xf32>
    %45 = vector.shape_cast %44 : vector<8xf32> to vector<8x1xf32>
    %46 = vector.broadcast %45 : vector<8x1xf32> to vector<8x8xf32>
    %47 = arith.subf %43, %46 : vector<8x8xf32>
    %48 = math.exp %47 : vector<8x8xf32>
    %cst_17 = arith.constant dense<0.000000e+00> : vector<8xf32>
    %49 = vector.multi_reduction <add>, %48, %cst_17 [1] : vector<8x8xf32> to vector<8xf32>
    %50 = vector.shape_cast %49 : vector<8xf32> to vector<8x1xf32>
    %51 = tpu.reciprocal %50 {approx = true} : vector<8x1xf32> -> vector<8x1xf32>
    %52 = vector.broadcast %51 : vector<8x1xf32> to vector<8x8xf32>
    %53 = arith.mulf %48, %52 : vector<8x8xf32>
    %54 = arith.truncf %53 : vector<8x8xf32> to vector<8x8xbf16>
    %cst_18 = arith.constant dense<0.000000e+00> : vector<8x8xf32>
    %55 = tpu.matmul %54, %38, %cst_18 {dimension_numbers = #tpu.dot_dimension_numbers<[1], [0], [0], [1], [0, 0, 1, 1], [], []>} : vector<8x8xbf16>, vector<8x8xbf16>, vector<8x8xf32> -> vector<8x8xf32>
    %56 = vector.extract_strided_slice %9 {offsets = [0, 16], sizes = [8, 8], strides = [1, 1]} : vector<8x96xf32> to vector<8x8xf32>
    %57 = arith.truncf %56 : vector<8x8xf32> to vector<8x8xbf16>
    %58 = vector.extract_strided_slice %9 {offsets = [0, 48], sizes = [8, 8], strides = [1, 1]} : vector<8x96xf32> to vector<8x8xf32>
    %59 = arith.truncf %58 : vector<8x8xf32> to vector<8x8xbf16>
    %60 = vector.extract_strided_slice %9 {offsets = [0, 80], sizes = [8, 8], strides = [1, 1]} : vector<8x96xf32> to vector<8x8xf32>
    %61 = arith.truncf %60 : vector<8x8xf32> to vector<8x8xbf16>
    %cst_19 = arith.constant dense<0.000000e+00> : vector<8x8xf32>
    %62 = tpu.matmul %57, %59, %cst_19 {dimension_numbers = #tpu.dot_dimension_numbers<[1], [1], [0], [0], [0, 0, 1, 0], [], []>} : vector<8x8xbf16>, vector<8x8xbf16>, vector<8x8xf32> -> vector<8x8xf32>
    %cst_20 = arith.constant 0.353553385 : f32
    %63 = vector.broadcast %cst_20 : f32 to vector<8x8xf32>
    %64 = arith.mulf %62, %63 : vector<8x8xf32>
    %65 = vector.broadcast %3 : vector<1x8xf32> to vector<8x8xf32>
    %66 = arith.addf %64, %65 : vector<8x8xf32>
    %cst_21 = arith.constant dense<0xFF800000> : vector<8xf32>
    %67 = vector.multi_reduction <maximumf>, %66, %cst_21 [1] : vector<8x8xf32> to vector<8xf32>
    %68 = vector.shape_cast %67 : vector<8xf32> to vector<8x1xf32>
    %69 = vector.broadcast %68 : vector<8x1xf32> to vector<8x8xf32>
    %70 = arith.subf %66, %69 : vector<8x8xf32>
    %71 = math.exp %70 : vector<8x8xf32>
    %cst_22 = arith.constant dense<0.000000e+00> : vector<8xf32>
    %72 = vector.multi_reduction <add>, %71, %cst_22 [1] : vector<8x8xf32> to vector<8xf32>
    %73 = vector.shape_cast %72 : vector<8xf32> to vector<8x1xf32>
    %74 = tpu.reciprocal %73 {approx = true} : vector<8x1xf32> -> vector<8x1xf32>
    %75 = vector.broadcast %74 : vector<8x1xf32> to vector<8x8xf32>
    %76 = arith.mulf %71, %75 : vector<8x8xf32>
    %77 = arith.truncf %76 : vector<8x8xf32> to vector<8x8xbf16>
    %cst_23 = arith.constant dense<0.000000e+00> : vector<8x8xf32>
    %78 = tpu.matmul %77, %61, %cst_23 {dimension_numbers = #tpu.dot_dimension_numbers<[1], [0], [0], [1], [0, 0, 1, 1], [], []>} : vector<8x8xbf16>, vector<8x8xbf16>, vector<8x8xf32> -> vector<8x8xf32>
    %79 = vector.extract_strided_slice %9 {offsets = [0, 24], sizes = [8, 8], strides = [1, 1]} : vector<8x96xf32> to vector<8x8xf32>
    %80 = arith.truncf %79 : vector<8x8xf32> to vector<8x8xbf16>
    %81 = vector.extract_strided_slice %9 {offsets = [0, 56], sizes = [8, 8], strides = [1, 1]} : vector<8x96xf32> to vector<8x8xf32>
    %82 = arith.truncf %81 : vector<8x8xf32> to vector<8x8xbf16>
    %83 = vector.extract_strided_slice %9 {offsets = [0, 88], sizes = [8, 8], strides = [1, 1]} : vector<8x96xf32> to vector<8x8xf32>
    %84 = arith.truncf %83 : vector<8x8xf32> to vector<8x8xbf16>
    %cst_24 = arith.constant dense<0.000000e+00> : vector<8x8xf32>
    %85 = tpu.matmul %80, %82, %cst_24 {dimension_numbers = #tpu.dot_dimension_numbers<[1], [1], [0], [0], [0, 0, 1, 0], [], []>} : vector<8x8xbf16>, vector<8x8xbf16>, vector<8x8xf32> -> vector<8x8xf32>
    %cst_25 = arith.constant 0.353553385 : f32
    %86 = vector.broadcast %cst_25 : f32 to vector<8x8xf32>
    %87 = arith.mulf %85, %86 : vector<8x8xf32>
    %88 = vector.broadcast %3 : vector<1x8xf32> to vector<8x8xf32>
    %89 = arith.addf %87, %88 : vector<8x8xf32>
    %cst_26 = arith.constant dense<0xFF800000> : vector<8xf32>
    %90 = vector.multi_reduction <maximumf>, %89, %cst_26 [1] : vector<8x8xf32> to vector<8xf32>
    %91 = vector.shape_cast %90 : vector<8xf32> to vector<8x1xf32>
    %92 = vector.broadcast %91 : vector<8x1xf32> to vector<8x8xf32>
    %93 = arith.subf %89, %92 : vector<8x8xf32>
    %94 = math.exp %93 : vector<8x8xf32>
    %cst_27 = arith.constant dense<0.000000e+00> : vector<8xf32>
    %95 = vector.multi_reduction <add>, %94, %cst_27 [1] : vector<8x8xf32> to vector<8xf32>
    %96 = vector.shape_cast %95 : vector<8xf32> to vector<8x1xf32>
    %97 = tpu.reciprocal %96 {approx = true} : vector<8x1xf32> -> vector<8x1xf32>
    %98 = vector.broadcast %97 : vector<8x1xf32> to vector<8x8xf32>
    %99 = arith.mulf %94, %98 : vector<8x8xf32>
    %100 = arith.truncf %99 : vector<8x8xf32> to vector<8x8xbf16>
    %cst_28 = arith.constant dense<0.000000e+00> : vector<8x8xf32>
    %101 = tpu.matmul %100, %84, %cst_28 {dimension_numbers = #tpu.dot_dimension_numbers<[1], [0], [0], [1], [0, 0, 1, 1], [], []>} : vector<8x8xbf16>, vector<8x8xbf16>, vector<8x8xf32> -> vector<8x8xf32>
    %102 = tpu.concatenate %32, %55, %78, %101 in 1 : vector<8x8xf32>, vector<8x8xf32>, vector<8x8xf32>, vector<8x8xf32> -> vector<8x32xf32>
    %103 = arith.truncf %102 : vector<8x32xf32> to vector<8x32xbf16>
    %c0_29 = arith.constant 0 : index
    %c0_30 = arith.constant 0 : index
    %104 = vector.load %arg5[%c0_29, %c0_30] : memref<32x32xbf16, #tpu.memory_space<vmem>>, vector<32x32xbf16>
    %cst_31 = arith.constant dense<0.000000e+00> : vector<8x32xf32>
    %105 = tpu.matmul %103, %104, %cst_31 {dimension_numbers = #tpu.dot_dimension_numbers<[1], [0], [0], [1], [0, 0, 1, 1], [], []>} : vector<8x32xbf16>, vector<32x32xbf16>, vector<8x32xf32> -> vector<8x32xf32>
    %c0_32 = arith.constant 0 : index
    %c0_33 = arith.constant 0 : index
    %106 = vector.load %arg6[%c0_32, %c0_33] : memref<1x32xf32, #tpu.memory_space<vmem>>, vector<1x32xf32>
    %107 = vector.broadcast %106 : vector<1x32xf32> to vector<8x32xf32>
    %108 = arith.addf %105, %107 : vector<8x32xf32>
    %109 = arith.addf %108, %1 : vector<8x32xf32>
    %c0_34 = arith.constant 0 : index
    %c0_35 = arith.constant 0 : index
    %110 = vector.load %arg7[%c0_34, %c0_35] : memref<1x32xf32, #tpu.memory_space<vmem>>, vector<1x32xf32>
    %c0_36 = arith.constant 0 : index
    %c0_37 = arith.constant 0 : index
    %111 = vector.load %arg8[%c0_36, %c0_37] : memref<1x32xf32, #tpu.memory_space<vmem>>, vector<1x32xf32>
    %cst_38 = arith.constant dense<0.000000e+00> : vector<8xf32>
    %112 = vector.multi_reduction <add>, %109, %cst_38 [1] : vector<8x32xf32> to vector<8xf32>
    %113 = vector.shape_cast %112 : vector<8xf32> to vector<8x1xf32>
    %cst_39 = arith.constant 3.200000e+01 : f32
    %114 = vector.broadcast %cst_39 : f32 to vector<8x1xf32>
    %115 = arith.divf %113, %114 : vector<8x1xf32>
    %116 = vector.broadcast %115 : vector<8x1xf32> to vector<8x32xf32>
    %117 = arith.subf %109, %116 : vector<8x32xf32>
    %118 = arith.mulf %117, %117 : vector<8x32xf32>
    %cst_40 = arith.constant dense<0.000000e+00> : vector<8xf32>
    %119 = vector.multi_reduction <add>, %118, %cst_40 [1] : vector<8x32xf32> to vector<8xf32>
    %120 = vector.shape_cast %119 : vector<8xf32> to vector<8x1xf32>
    %cst_41 = arith.constant 3.200000e+01 : f32
    %121 = vector.broadcast %cst_41 : f32 to vector<8x1xf32>
    %122 = arith.divf %120, %121 : vector<8x1xf32>
    %123 = vector.broadcast %115 : vector<8x1xf32> to vector<8x32xf32>
    %124 = arith.subf %109, %123 : vector<8x32xf32>
    %cst_42 = arith.constant 9.99999996E-13 : f32
    %125 = vector.broadcast %cst_42 : f32 to vector<8x1xf32>
    %126 = arith.addf %122, %125 : vector<8x1xf32>
    %127 = math.rsqrt %126 : vector<8x1xf32>
    %128 = vector.broadcast %127 : vector<8x1xf32> to vector<8x32xf32>
    %129 = arith.mulf %124, %128 : vector<8x32xf32>
    %130 = vector.broadcast %110 : vector<1x32xf32> to vector<8x32xf32>
    %131 = arith.mulf %129, %130 : vector<8x32xf32>
    %132 = vector.broadcast %111 : vector<1x32xf32> to vector<8x32xf32>
    %133 = arith.addf %131, %132 : vector<8x32xf32>
    %134 = arith.truncf %133 : vector<8x32xf32> to vector<8x32xbf16>
    %c0_43 = arith.constant 0 : index
    %c0_44 = arith.constant 0 : index
    %135 = vector.load %arg9[%c0_43, %c0_44] : memref<32x64xbf16, #tpu.memory_space<vmem>>, vector<32x64xbf16>
    %cst_45 = arith.constant dense<0.000000e+00> : vector<8x64xf32>
    %136 = tpu.matmul %134, %135, %cst_45 {dimension_numbers = #tpu.dot_dimension_numbers<[1], [0], [0], [1], [0, 0, 1, 1], [], []>} : vector<8x32xbf16>, vector<32x64xbf16>, vector<8x64xf32> -> vector<8x64xf32>
    %c0_46 = arith.constant 0 : index
    %c0_47 = arith.constant 0 : index
    %137 = vector.load %arg10[%c0_46, %c0_47] : memref<1x64xf32, #tpu.memory_space<vmem>>, vector<1x64xf32>
    %138 = vector.broadcast %137 : vector<1x64xf32> to vector<8x64xf32>
    %139 = arith.addf %136, %138 : vector<8x64xf32>
    %cst_48 = arith.constant 5.000000e-01 : f32
    %140 = vector.broadcast %cst_48 : f32 to vector<8x64xf32>
    %141 = arith.mulf %140, %139 : vector<8x64xf32>
    %cst_49 = arith.constant 4.471500e-02 : f32
    %142 = vector.broadcast %cst_49 : f32 to vector<8x64xf32>
    %143 = arith.mulf %142, %139 : vector<8x64xf32>
    %144 = arith.mulf %143, %139 : vector<8x64xf32>
    %145 = arith.mulf %144, %139 : vector<8x64xf32>
    %146 = arith.addf %139, %145 : vector<8x64xf32>
    %cst_50 = arith.constant 0.797884583 : f32
    %147 = vector.broadcast %cst_50 : f32 to vector<8x64xf32>
    %148 = arith.mulf %147, %146 : vector<8x64xf32>
    %149 = math.tanh %148 : vector<8x64xf32>
    %cst_51 = arith.constant 1.000000e+00 : f32
    %150 = vector.broadcast %cst_51 : f32 to vector<8x64xf32>
    %151 = arith.addf %150, %149 : vector<8x64xf32>
    %152 = arith.mulf %141, %151 : vector<8x64xf32>
    %153 = arith.truncf %152 : vector<8x64xf32> to vector<8x64xbf16>
    %c0_52 = arith.constant 0 : index
    %c0_53 = arith.constant 0 : index
    %154 = vector.load %arg11[%c0_52, %c0_53] : memref<64x32xbf16, #tpu.memory_space<vmem>>, vector<64x32xbf16>
    %cst_54 = arith.constant dense<0.000000e+00> : vector<8x32xf32>
    %155 = tpu.matmul %153, %154, %cst_54 {dimension_numbers = #tpu.dot_dimension_numbers<[1], [0], [0], [1], [0, 0, 1, 1], [], []>} : vector<8x64xbf16>, vector<64x32xbf16>, vector<8x32xf32> -> vector<8x32xf32>
    %c0_55 = arith.constant 0 : index
    %c0_56 = arith.constant 0 : index
    %156 = vector.load %arg12[%c0_55, %c0_56] : memref<1x32xf32, #tpu.memory_space<vmem>>, vector<1x32xf32>
    %157 = vector.broadcast %156 : vector<1x32xf32> to vector<8x32xf32>
    %158 = arith.addf %155, %157 : vector<8x32xf32>
    %159 = arith.addf %158, %133 : vector<8x32xf32>
    %c0_57 = arith.constant 0 : index
    %c0_58 = arith.constant 0 : index
    %160 = vector.load %arg13[%c0_57, %c0_58] : memref<1x32xf32, #tpu.memory_space<vmem>>, vector<1x32xf32>
    %c0_59 = arith.constant 0 : index
    %c0_60 = arith.constant 0 : index
    %161 = vector.load %arg14[%c0_59, %c0_60] : memref<1x32xf32, #tpu.memory_space<vmem>>, vector<1x32xf32>
    %cst_61 = arith.constant dense<0.000000e+00> : vector<8xf32>
    %162 = vector.multi_reduction <add>, %159, %cst_61 [1] : vector<8x32xf32> to vector<8xf32>
    %163 = vector.shape_cast %162 : vector<8xf32> to vector<8x1xf32>
    %cst_62 = arith.constant 3.200000e+01 : f32
    %164 = vector.broadcast %cst_62 : f32 to vector<8x1xf32>
    %165 = arith.divf %163, %164 : vector<8x1xf32>
    %166 = vector.broadcast %165 : vector<8x1xf32> to vector<8x32xf32>
    %167 = arith.subf %159, %166 : vector<8x32xf32>
    %168 = arith.mulf %167, %167 : vector<8x32xf32>
    %cst_63 = arith.constant dense<0.000000e+00> : vector<8xf32>
    %169 = vector.multi_reduction <add>, %168, %cst_63 [1] : vector<8x32xf32> to vector<8xf32>
    %170 = vector.shape_cast %169 : vector<8xf32> to vector<8x1xf32>
    %cst_64 = arith.constant 3.200000e+01 : f32
    %171 = vector.broadcast %cst_64 : f32 to vector<8x1xf32>
    %172 = arith.divf %170, %171 : vector<8x1xf32>
    %173 = vector.broadcast %165 : vector<8x1xf32> to vector<8x32xf32>
    %174 = arith.subf %159, %173 : vector<8x32xf32>
    %cst_65 = arith.constant 9.99999996E-13 : f32
    %175 = vector.broadcast %cst_65 : f32 to vector<8x1xf32>
    %176 = arith.addf %172, %175 : vector<8x1xf32>
    %177 = math.rsqrt %176 : vector<8x1xf32>
    %178 = vector.broadcast %177 : vector<8x1xf32> to vector<8x32xf32>
    %179 = arith.mulf %174, %178 : vector<8x32xf32>
    %180 = vector.broadcast %160 : vector<1x32xf32> to vector<8x32xf32>
    %181 = arith.mulf %179, %180 : vector<8x32xf32>
    %182 = vector.broadcast %161 : vector<1x32xf32> to vector<8x32xf32>
    %183 = arith.addf %181, %182 : vector<8x32xf32>
    %c0_66 = arith.constant 0 : index
    %c0_67 = arith.constant 0 : index
    %c0_68 = arith.constant 0 : index
    %184 = vector.load %arg15[%c0_66, %c0_67, %c0_68] : memref<1x8x32xf32, #tpu.memory_space<vmem>>, vector<1x8x32xf32>
    %185 = vector.shape_cast %184 : vector<1x8x32xf32> to vector<8x32xf32>
    %186 = vector.shape_cast %183 : vector<8x32xf32> to vector<1x8x32xf32>
    tpu.vector_store %arg15[%c0_66, %c0_67, %c0_68], %186 {strides = array<i32>} : memref<1x8x32xf32, #tpu.memory_space<vmem>>, vector<1x8x32xf32>,
    return
  }
  func.func @transform_0(%arg0: i32) -> (i32, i32, i32) {
    %c0_i32 = arith.constant 0 : i32
    %c0_i32_0 = arith.constant 0 : i32
    %c0_i32_1 = arith.constant 0 : i32
    return %arg0, %c0_i32, %c0_i32_0 : i32, i32, i32
  }
  func.func @transform_1(%arg0: i32) -> (i32, i32, i32) {
    %c0_i32 = arith.constant 0 : i32
    %c0_i32_0 = arith.constant 0 : i32
    %c0_i32_1 = arith.constant 0 : i32
    return %arg0, %c0_i32, %c0_i32_0 : i32, i32, i32
  }
  func.func @transform_2(%arg0: i32) -> (i32, i32) {
    %c0_i32 = arith.constant 0 : i32
    %c0_i32_0 = arith.constant 0 : i32
    %c0_i32_1 = arith.constant 0 : i32
    return %c0_i32, %c0_i32_0 : i32, i32
  }
  func.func @transform_3(%arg0: i32) -> (i32, i32) {
    %c0_i32 = arith.constant 0 : i32
    %c0_i32_0 = arith.constant 0 : i32
    %c0_i32_1 = arith.constant 0 : i32
    return %c0_i32, %c0_i32_0 : i32, i32
  }
  func.func @transform_4(%arg0: i32) -> (i32, i32) {
    %c0_i32 = arith.constant 0 : i32
    %c0_i32_0 = arith.constant 0 : i32
    %c0_i32_1 = arith.constant 0 : i32
    return %c0_i32, %c0_i32_0 : i32, i32
  }
  func.func @transform_5(%arg0: i32) -> (i32, i32) {
    %c0_i32 = arith.constant 0 : i32
    %c0_i32_0 = arith.constant 0 : i32
    %c0_i32_1 = arith.constant 0 : i32
    return %c0_i32, %c0_i32_0 : i32, i32
  }
  func.func @transform_6(%arg0: i32) -> (i32, i32) {
    %c0_i32 = arith.constant 0 : i32
    %c0_i32_0 = arith.constant 0 : i32
    %c0_i32_1 = arith.constant 0 : i32
    return %c0_i32, %c0_i32_0 : i32, i32
  }
  func.func @transform_7(%arg0: i32) -> (i32, i32) {
    %c0_i32 = arith.constant 0 : i32
    %c0_i32_0 = arith.constant 0 : i32
    %c0_i32_1 = arith.constant 0 : i32
    return %c0_i32, %c0_i32_0 : i32, i32
  }
  func.func @transform_8(%arg0: i32) -> (i32, i32) {
    %c0_i32 = arith.constant 0 : i32
    %c0_i32_0 = arith.constant 0 : i32
    %c0_i32_1 = arith.constant 0 : i32
    return %c0_i32, %c0_i32_0 : i32, i32
  }
  func.func @transform_9(%arg0: i32) -> (i32, i32) {
    %c0_i32 = arith.constant 0 : i32
    %c0_i32_0 = arith.constant 0 : i32
    %c0_i32_1 = arith.constant 0 : i32
    return %c0_i32, %c0_i32_0 : i32, i32
  }
  func.func @transform_10(%arg0: i32) -> (i32, i32) {
    %c0_i32 = arith.constant 0 : i32
    %c0_i32_0 = arith.constant 0 : i32
    %c0_i32_1 = arith.constant 0 : i32
    return %c0_i32, %c0_i32_0 : i32, i32
  }
  func.func @transform_11(%arg0: i32) -> (i32, i32) {
    %c0_i32 = arith.constant 0 : i32
    %c0_i32_0 = arith.constant 0 : i32
    %c0_i32_1 = arith.constant 0 : i32
    return %c0_i32, %c0_i32_0 : i32, i32
  }
  func.func @transform_12(%arg0: i32) -> (i32, i32) {
    %c0_i32 = arith.constant 0 : i32
    %c0_i32_0 = arith.constant 0 : i32
    %c0_i32_1 = arith.constant 0 : i32
    return %c0_i32, %c0_i32_0 : i32, i32
  }
  func.func @transform_13(%arg0: i32) -> (i32, i32) {
    %c0_i32 = arith.constant 0 : i32
    %c0_i32_0 = arith.constant 0 : i32
    %c0_i32_1 = arith.constant 0 : i32
    return %c0_i32, %c0_i32_0 : i32, i32
  }
  func.func @transform_14(%arg0: i32) -> (i32, i32, i32) {
    %c0_i32 = arith.constant 0 : i32
    %c0_i32_0 = arith.constant 0 : i32
    %c0_i32_1 = arith.constant 0 : i32
    return %arg0, %c0_i32, %c0_i32_0 : i32, i32, i32
  }
}

</mosaic_0001>

<llo_original>
// kernel: bert_forward.3
$region0: #{bert_forward.3}
  #allocation0 [shape = 'u32[]', space=smem, size = 0x4, offset = 0x4, fixed_abs, tag = 'smem constant byte address 0x4 - core index']
  #allocation1 [shape = 'u32[144,128]{1,0:T(1,128)}', space=vmem, size = 0x12000, scoped, tag = 'internal scratch']
  %s0 = inlined_call_operand.vmem [shape: f32[16,32], index: 0, kind: input, shape index: {}]
  %s1 = inlined_call_operand.vmem [shape: f32[1,32], index: 1, kind: input, shape index: {}]
  %s2 = inlined_call_operand.vmem [shape: f32[1,32], index: 2, kind: input, shape index: {}]
  %s3 = inlined_call_operand.vmem [shape: f32[16,32], index: 3, kind: output, shape index: {}]
  %s4 = sld [smem:[#allocation0]]
  $region45: #{bert_forward.3} parent=0
    _
  %s6 = ssub.s32 1, %s4
  %s7 = scalar_select 0, %s6, %s4
  loop: start=0, step=1, limit=4
  $region2: #{bert_forward.3} parent=0 // loop_pre_header
    _
  $region3: #{bert_forward.3} parent=0 // loop_header
    %s9 = sphi 0, %s13
    %p10 = scmp.ge.s32.totalorder %s9, 4
    %s19 = sphi 0, %s21
    %s22 = sphi 0, %s19
    %s23 = sphi 0, %s22
    %s39 = sphi 0, %s23
    %s43 = sphi 0, %s43
    %s45 = sphi 0, %s43
    %s46 = sphi 0, %s45
    %s60 = sphi 0, %s46
    %s64 = sphi 0, %s64
    %s66 = sphi 0, %s64
    %s67 = sphi 0, %s66
    %s81 = sphi 0, %s67
    %s87 = sphi 0, %s89
    %s90 = sphi 0, %s87
    %s91 = sphi 0, %s90
    %s107 = sphi 0, %s91
  $region4: #{bert_forward.3} parent=0 // loop_header_branch
    %12 = sbr.rel (%p10) target = $region8
  $region5: #{bert_forward.3} parent=0 // loop_body
    %s14 = ssub.s32 %s9, 1
    %s15 = ssub.s32 %s9, 2
    %s16 = sadd.s32 %s9, 1
    %s17 = ssub.s32 %s9, %s16
    %p18 = scmp.eq.s32.totalorder %s17, 0
    %s20 = sadd.s32 %s19, 1
    %s21 = scalar_select %p18, %s19, %s20
    %p24 = pneg %p18
    %p25 = scmp.eq.s32.totalorder %s9, 1
    %p26 = por %p24, %p25
    %p27 = scmp.ne.s32.totalorder %s19, %s22
    %p28 = scmp.eq.s32.totalorder %s9, 0
    %p29 = por %p27, %p28
    %p30 = scmp.ne.s32.totalorder %s19, %s22
    %p31 = scmp.eq.s32.totalorder %s14, 1
    %p32 = por %p30, %p31
    %p33 = scmp.ne.s32.totalorder %s22, %s23
    %p34 = scmp.eq.s32.totalorder %s14, 0
    %p35 = por %p33, %p34
    %p36 = scmp.ne.s32.totalorder %s22, %s23
    %p37 = scmp.eq.s32.totalorder %s15, 1
    %p38 = por %p36, %p37
    %p40 = scmp.ne.s32.totalorder %s23, %s39
    %p41 = scmp.eq.s32.totalorder %s15, 0
    %p42 = por %p40, %p41
    %s44 = sadd.s32 %s43, 1
    %p47 = scmp.eq.s32.totalorder %s9, 1
    %p48 = scmp.ne.s32.totalorder %s43, %s45
    %p49 = scmp.eq.s32.totalorder %s9, 0
    %p50 = por %p48, %p49
    %p51 = scmp.ne.s32.totalorder %s43, %s45
    %p52 = scmp.eq.s32.totalorder %s14, 1
    %p53 = por %p51, %p52
    %p54 = scmp.ne.s32.totalorder %s45, %s46
    %p55 = scmp.eq.s32.totalorder %s14, 0
    %p56 = por %p54, %p55
    %p57 = scmp.ne.s32.totalorder %s45, %s46
    %p58 = scmp.eq.s32.totalorder %s15, 1
    %p59 = por %p57, %p58
    %p61 = scmp.ne.s32.totalorder %s46, %s60
    %p62 = scmp.eq.s32.totalorder %s15, 0
    %p63 = por %p61, %p62
    %s65 = sadd.s32 %s64, 1
    %p68 = scmp.eq.s32.totalorder %s9, 1
    %p69 = scmp.ne.s32.totalorder %s64, %s66
    %p70 = scmp.eq.s32.totalorder %s9, 0
    %p71 = por %p69, %p70
    %p72 = scmp.ne.s32.totalorder %s64, %s66
    %p73 = scmp.eq.s32.totalorder %s14, 1
    %p74 = por %p72, %p73
    %p75 = scmp.ne.s32.totalorder %s66, %s67
    %p76 = scmp.eq.s32.totalorder %s14, 0
    %p77 = por %p75, %p76
    %p78 = scmp.ne.s32.totalorder %s66, %s67
    %p79 = scmp.eq.s32.totalorder %s15, 1
    %p80 = por %p78, %p79
    %p82 = scmp.ne.s32.totalorder %s67, %s81
    %p83 = scmp.eq.s32.totalorder %s15, 0
    %p84 = por %p82, %p83
    %s85 = ssub.s32 %s9, %s16
    %p86 = scmp.eq.s32.totalorder %s85, 0
    %s88 = sadd.s32 %s87, 1
    %s89 = scalar_select %p86, %s87, %s88
    %p92 = pneg %p86
    %p93 = scmp.eq.s32.totalorder %s9, 1
    %p94 = por %p92, %p93
    %p95 = scmp.ne.s32.totalorder %s87, %s90
    %p96 = scmp.eq.s32.totalorder %s9, 0
    %p97 = por %p95, %p96
    %p98 = scmp.ne.s32.totalorder %s87, %s90
    %p99 = scmp.eq.s32.totalorder %s14, 1
    %p100 = por %p98, %p99
    %p101 = scmp.ne.s32.totalorder %s90, %s91
    %p102 = scmp.eq.s32.totalorder %s14, 0
    %p103 = por %p101, %p102
    %p104 = scmp.ne.s32.totalorder %s90, %s91
    %p105 = scmp.eq.s32.totalorder %s15, 1
    %p106 = por %p104, %p105
    %p108 = scmp.ne.s32.totalorder %s91, %s107
    %p109 = scmp.eq.s32.totalorder %s15, 0
    %p110 = por %p108, %p109
    %p111 = scmp.le.s32.totalorder 1, %s9
    %p112 = scmp.lt.s32.totalorder %s9, 3
    %p113 = pnand %p111, %p112
    %p114 = pneg %p113
    // Predicated region
    $region9: #{bert_forward.3} parent=5 // pred_check
      _
    $region10: #{bert_forward.3} parent=5 // pred_check_branch
      %116 = sbr.rel (%p113) target = $region12
    $region11: #{bert_forward.3} parent=5 // pred_region
      %s117 = ssub.s32 %s9, 1
      // Predicated region
      $region13: #{bert_forward.3} parent=11 // pred_check
        %p118 = pneg %p56
      $region14: #{bert_forward.3} parent=11 // pred_check_branch
        %120 = sbr.rel (%p118) target = $region16
      $region15: #{bert_forward.3} parent=11 // pred_region
        _
      $region16: #{bert_forward.3} parent=11 // pred_fallthru
        _
      // Predicated region
      $region17: #{bert_forward.3} parent=11 // pred_check
        %p121 = pneg %p77
      $region18: #{bert_forward.3} parent=11 // pred_check_branch
        %123 = sbr.rel (%p121) target = $region20
      $region19: #{bert_forward.3} parent=11 // pred_region
        _
      $region20: #{bert_forward.3} parent=11 // pred_fallthru
        _
    $region12: #{bert_forward.3} parent=5 // pred_fallthru
      _
    %p124 = scmp.lt.s32.totalorder %s9, 2
    // Predicated region
    $region21: #{bert_forward.3} parent=5 // pred_check
      %p125 = pneg %p124
    $region22: #{bert_forward.3} parent=5 // pred_check_branch
      %127 = sbr.rel (%p125) target = $region24
    $region23: #{bert_forward.3} parent=5 // pred_region
      // Predicated region
      $region25: #{bert_forward.3} parent=23 // pred_check
        %p128 = pneg %p29
      $region26: #{bert_forward.3} parent=23 // pred_check_branch
        %130 = sbr.rel (%p128) target = $region28
      $region27: #{bert_forward.3} parent=23 // pred_region
        %p131 = scmp.lt.s32.totalorder %s9, 1
        %s132 = scalar_select %p131, %s9, 1
        %s133 = smul.addr %s132, 8
        %s134 = scalar_lea.vmem %s0, %s133
      $region28: #{bert_forward.3} parent=23 // pred_fallthru
        _
    $region24: #{bert_forward.3} parent=5 // pred_fallthru
      _
    %p135 = scmp.le.s32.totalorder 1, %s9
    %p136 = scmp.lt.s32.totalorder %s9, 3
    %p137 = pnand %p135, %p136
    %p138 = pneg %p137
    // Predicated region
    $region29: #{bert_forward.3} parent=5 // pred_check
      _
    $region30: #{bert_forward.3} parent=5 // pred_check_branch
      %140 = sbr.rel (%p137) target = $region32
    $region31: #{bert_forward.3} parent=5 // pred_region
      %s141 = ssub.s32 %s9, 1
      %p142 = scmp.lt.s32.totalorder %s14, 1
      %s143 = scalar_select %p142, %s14, 1
      %s144 = smul.addr %s143, 8
      %s145 = scalar_lea.vmem %s0, %s144
      %p146 = pneg %p35
      %p147 = pneg %p32
      %p148 = pneg %p56
      %p149 = pneg %p53
      %p150 = pneg %p77
      %p151 = pneg %p74
      %p152 = pneg %p103
      %p153 = pneg %p100
      %p154 = scmp.lt.s32.totalorder %s14, 1
      %s155 = scalar_select %p154, %s14, 1
      %s156 = smul.addr %s155, 8
      %s157 = scalar_lea.vmem %s3, %s156
      %p158 = scmp.lt.s32.totalorder %s14, 1
      %s159 = scalar_select %p158, %s14, 1
      %s160 = smul.addr %s159, 8
      %s161 = scalar_lea.vmem %s0, %s160
      %p162 = scmp.lt.s32.totalorder %s14, 1
      %s163 = scalar_select %p162, %s14, 1
      %s164 = smul.addr %s163, 8
      %s165 = scalar_lea.vmem %s3, %s164
      %v166 = vld [vmem:[%s161] sm:$0xff]
      %v167 = vld [vmem:[%s1] sm:$0x1]
      %v168 = vld [vmem:[%s2] sm:$0x1]
      %vm169 = vcmask 261120
      %v170 = vsel %vm169, %v166, 0.0
      %171 = vadd.xlane.f32.xlu0 %v170
      %v172 = vpop.xlane.xlu0 %171
      %v173 = vrcp.pop 32.0
      %v174 = vmul.f32 %v172, %v173
      %v175 = vsub.f32 %v166, %v174
      %v176 = vmul.f32 %v175, %v175
      %v177 = vsel %vm169, %v176, 0.0
      %178 = vadd.xlane.f32.xlu0 %v177
      %v179 = vpop.xlane.xlu0 %178
      %v180 = vmul.f32 %v179, %v173
      %v181 = vadd.f32 %v180, 1e-12
      %v182 = vrsqrt.pop %v181
      %v183 = vmul.f32 %v175, %v182
      %v185 = vlaneseq
      %v186 = vshrl.u32 %v185, 7
      %v187 = vsub.s32 0, %v186
      %v188 = vrot.slane %v167, %v187
      %v190 = vmul.f32 %v183, %v188
      %v192 = vlaneseq
      %v193 = vshrl.u32 %v192, 7
      %v194 = vsub.s32 0, %v193
      %v195 = vrot.slane %v168, %v194
      %v197 = vadd.f32 %v190, %v195
      %198 = vst.msk [vmem:[%s165] sm:$0xff] %vm169, %v197
      %p199 = scmp.lt.s32.totalorder %s14, 1
      %s200 = scalar_select %p199, %s14, 1
      %s201 = smul.addr %s200, 8
      %s202 = scalar_lea.vmem %s3, %s201
      // Predicated region
      $region33: #{bert_forward.3} parent=31 // pred_check
        %p203 = pneg %p100
      $region34: #{bert_forward.3} parent=31 // pred_check_branch
        %205 = sbr.rel (%p203) target = $region36
      $region35: #{bert_forward.3} parent=31 // pred_region
        _
      $region36: #{bert_forward.3} parent=31 // pred_fallthru
        _
    $region32: #{bert_forward.3} parent=5 // pred_fallthru
      _
    %p206 = scmp.le.s32.totalorder 2, %s9
    // Predicated region
    $region37: #{bert_forward.3} parent=5 // pred_check
      %p207 = pneg %p206
    $region38: #{bert_forward.3} parent=5 // pred_check_branch
      %209 = sbr.rel (%p207) target = $region40
    $region39: #{bert_forward.3} parent=5 // pred_region
      %s210 = ssub.s32 %s9, 2
      // Predicated region
      $region41: #{bert_forward.3} parent=39 // pred_check
        %p211 = pneg %p106
      $region42: #{bert_forward.3} parent=39 // pred_check_branch
        %213 = sbr.rel (%p211) target = $region44
      $region43: #{bert_forward.3} parent=39 // pred_region
        %p214 = scmp.lt.s32.totalorder %s15, 1
        %s215 = scalar_select %p214, %s15, 1
        %s216 = smul.addr %s215, 8
        %s217 = scalar_lea.vmem %s3, %s216
      $region44: #{bert_forward.3} parent=39 // pred_fallthru
        _
    $region40: #{bert_forward.3} parent=5 // pred_fallthru
      _
  $region6: #{bert_forward.3} parent=0 // loop_footer
    %s13 = sadd.s32 1, %s9
  $region7: #{bert_forward.3} parent=0 // loop_footer_branch
    %8 = sbr.rel target = $region3
  $region8: #{bert_forward.3} parent=0 // loop_exit
    _

// kernel: bert_forward.4
$region0: #{bert_forward.4}
  #allocation0 [shape = 'u32[]', space=smem, size = 0x4, offset = 0x4, fixed_abs, tag = 'smem constant byte address 0x4 - core index']
  #allocation1 [shape = 'u32[144,128]{1,0:T(1,128)}', space=vmem, size = 0x12000, scoped, tag = 'internal scratch']
  %s0 = inlined_call_operand.vmem [shape: f32[2,8,32], index: 0, kind: input, shape index: {}]
  %s1 = inlined_call_operand.vmem [shape: f32[2,1,8], index: 1, kind: input, shape index: {}]
  %s2 = inlined_call_operand.vmem [shape: bf16[32,96], index: 2, kind: input, shape index: {}]
  %s3 = inlined_call_operand.vmem [shape: f32[1,96], index: 3, kind: input, shape index: {}]
  %s4 = inlined_call_operand.vmem [shape: bf16[32,32], index: 4, kind: input, shape index: {}]
  %s5 = inlined_call_operand.vmem [shape: f32[1,32], index: 5, kind: input, shape index: {}]
  %s6 = inlined_call_operand.vmem [shape: f32[1,32], index: 6, kind: input, shape index: {}]
  %s7 = inlined_call_operand.vmem [shape: f32[1,32], index: 7, kind: input, shape index: {}]
  %s8 = inlined_call_operand.vmem [shape: bf16[32,64], index: 8, kind: input, shape index: {}]
  %s9 = inlined_call_operand.vmem [shape: f32[1,64], index: 9, kind: input, shape index: {}]
  %s10 = inlined_call_operand.vmem [shape: bf16[64,32], index: 10, kind: input, shape index: {}]
  %s11 = inlined_call_operand.vmem [shape: f32[1,32], index: 11, kind: input, shape index: {}]
  %s12 = inlined_call_operand.vmem [shape: f32[1,32], index: 12, kind: input, shape index: {}]
  %s13 = inlined_call_operand.vmem [shape: f32[1,32], index: 13, kind: input, shape index: {}]
  %s14 = inlined_call_operand.vmem [shape: f32[2,8,32], index: 14, kind: output, shape index: {}]
  %s15 = sld [smem:[#allocation0]]
  $region89: #{bert_forward.4} parent=0
    _
  %s17 = ssub.s32 1, %s15
  %s18 = scalar_select 0, %s17, %s15
  loop: start=0, step=1, limit=4
  $region2: #{bert_forward.4} parent=0 // loop_pre_header
    _
  $region3: #{bert_forward.4} parent=0 // loop_header
    %s20 = sphi 0, %s24
    %p21 = scmp.ge.s32.totalorder %s20, 4
    %s30 = sphi 0, %s32
    %s33 = sphi 0, %s30
    %s34 = sphi 0, %s33
    %s50 = sphi 0, %s34
    %s56 = sphi 0, %s58
    %s59 = sphi 0, %s56
    %s60 = sphi 0, %s59
    %s76 = sphi 0, %s60
    %s80 = sphi 0, %s80
    %s82 = sphi 0, %s80
    %s83 = sphi 0, %s82
    %s97 = sphi 0, %s83
    %s101 = sphi 0, %s101
    %s103 = sphi 0, %s101
    %s104 = sphi 0, %s103
    %s118 = sphi 0, %s104
    %s122 = sphi 0, %s122
    %s124 = sphi 0, %s122
    %s125 = sphi 0, %s124
    %s139 = sphi 0, %s125
    %s143 = sphi 0, %s143
    %s145 = sphi 0, %s143
    %s146 = sphi 0, %s145
    %s160 = sphi 0, %s146
    %s164 = sphi 0, %s164
    %s166 = sphi 0, %s164
    %s167 = sphi 0, %s166
    %s181 = sphi 0, %s167
    %s185 = sphi 0, %s185
    %s187 = sphi 0, %s185
    %s188 = sphi 0, %s187
    %s202 = sphi 0, %s188
    %s206 = sphi 0, %s206
    %s208 = sphi 0, %s206
    %s209 = sphi 0, %s208
    %s223 = sphi 0, %s209
    %s227 = sphi 0, %s227
    %s229 = sphi 0, %s227
    %s230 = sphi 0, %s229
    %s244 = sphi 0, %s230
    %s248 = sphi 0, %s248
    %s250 = sphi 0, %s248
    %s251 = sphi 0, %s250
    %s265 = sphi 0, %s251
    %s269 = sphi 0, %s269
    %s271 = sphi 0, %s269
    %s272 = sphi 0, %s271
    %s286 = sphi 0, %s272
    %s290 = sphi 0, %s290
    %s292 = sphi 0, %s290
    %s293 = sphi 0, %s292
    %s307 = sphi 0, %s293
    %s311 = sphi 0, %s311
    %s313 = sphi 0, %s311
    %s314 = sphi 0, %s313
    %s328 = sphi 0, %s314
    %s334 = sphi 0, %s336
    %s337 = sphi 0, %s334
    %s338 = sphi 0, %s337
    %s354 = sphi 0, %s338
  $region4: #{bert_forward.4} parent=0 // loop_header_branch
    %23 = sbr.rel (%p21) target = $region8
  $region5: #{bert_forward.4} parent=0 // loop_body
    %s25 = ssub.s32 %s20, 1
    %s26 = ssub.s32 %s20, 2
    %s27 = sadd.s32 %s20, 1
    %s28 = ssub.s32 %s20, %s27
    %p29 = scmp.eq.s32.totalorder %s28, 0
    %s31 = sadd.s32 %s30, 1
    %s32 = scalar_select %p29, %s30, %s31
    %p35 = pneg %p29
    %p36 = scmp.eq.s32.totalorder %s20, 1
    %p37 = por %p35, %p36
    %p38 = scmp.ne.s32.totalorder %s30, %s33
    %p39 = scmp.eq.s32.totalorder %s20, 0
    %p40 = por %p38, %p39
    %p41 = scmp.ne.s32.totalorder %s30, %s33
    %p42 = scmp.eq.s32.totalorder %s25, 1
    %p43 = por %p41, %p42
    %p44 = scmp.ne.s32.totalorder %s33, %s34
    %p45 = scmp.eq.s32.totalorder %s25, 0
    %p46 = por %p44, %p45
    %p47 = scmp.ne.s32.totalorder %s33, %s34
    %p48 = scmp.eq.s32.totalorder %s26, 1
    %p49 = por %p47, %p48
    %p51 = scmp.ne.s32.totalorder %s34, %s50
    %p52 = scmp.eq.s32.totalorder %s26, 0
    %p53 = por %p51, %p52
    %s54 = ssub.s32 %s20, %s27
    %p55 = scmp.eq.s32.totalorder %s54, 0
    %s57 = sadd.s32 %s56, 1
    %s58 = scalar_select %p55, %s56, %s57
    %p61 = pneg %p55
    %p62 = scmp.eq.s32.totalorder %s20, 1
    %p63 = por %p61, %p62
    %p64 = scmp.ne.s32.totalorder %s56, %s59
    %p65 = scmp.eq.s32.totalorder %s20, 0
    %p66 = por %p64, %p65
    %p67 = scmp.ne.s32.totalorder %s56, %s59
    %p68 = scmp.eq.s32.totalorder %s25, 1
    %p69 = por %p67, %p68
    %p70 = scmp.ne.s32.totalorder %s59, %s60
    %p71 = scmp.eq.s32.totalorder %s25, 0
    %p72 = por %p70, %p71
    %p73 = scmp.ne.s32.totalorder %s59, %s60
    %p74 = scmp.eq.s32.totalorder %s26, 1
    %p75 = por %p73, %p74
    %p77 = scmp.ne.s32.totalorder %s60, %s76
    %p78 = scmp.eq.s32.totalorder %s26, 0
    %p79 = por %p77, %p78
    %s81 = sadd.s32 %s80, 1
    %p84 = scmp.eq.s32.totalorder %s20, 1
    %p85 = scmp.ne.s32.totalorder %s80, %s82
    %p86 = scmp.eq.s32.totalorder %s20, 0
    %p87 = por %p85, %p86
    %p88 = scmp.ne.s32.totalorder %s80, %s82
    %p89 = scmp.eq.s32.totalorder %s25, 1
    %p90 = por %p88, %p89
    %p91 = scmp.ne.s32.totalorder %s82, %s83
    %p92 = scmp.eq.s32.totalorder %s25, 0
    %p93 = por %p91, %p92
    %p94 = scmp.ne.s32.totalorder %s82, %s83
    %p95 = scmp.eq.s32.totalorder %s26, 1
    %p96 = por %p94, %p95
    %p98 = scmp.ne.s32.totalorder %s83, %s97
    %p99 = scmp.eq.s32.totalorder %s26, 0
    %p100 = por %p98, %p99
    %s102 = sadd.s32 %s101, 1
    %p105 = scmp.eq.s32.totalorder %s20, 1
    %p106 = scmp.ne.s32.totalorder %s101, %s103
    %p107 = scmp.eq.s32.totalorder %s20, 0
    %p108 = por %p106, %p107
    %p109 = scmp.ne.s32.totalorder %s101, %s103
    %p110 = scmp.eq.s32.totalorder %s25, 1
    %p111 = por %p109, %p110
    %p112 = scmp.ne.s32.totalorder %s103, %s104
    %p113 = scmp.eq.s32.totalorder %s25, 0
    %p114 = por %p112, %p113
    %p115 = scmp.ne.s32.totalorder %s103, %s104
    %p116 = scmp.eq.s32.totalorder %s26, 1
    %p117 = por %p115, %p116
    %p119 = scmp.ne.s32.totalorder %s104, %s118
    %p120 = scmp.eq.s32.totalorder %s26, 0
    %p121 = por %p119, %p120
    %s123 = sadd.s32 %s122, 1
    %p126 = scmp.eq.s32.totalorder %s20, 1
    %p127 = scmp.ne.s32.totalorder %s122, %s124
    %p128 = scmp.eq.s32.totalorder %s20, 0
    %p129 = por %p127, %p128
    %p130 = scmp.ne.s32.totalorder %s122, %s124
    %p131 = scmp.eq.s32.totalorder %s25, 1
    %p132 = por %p130, %p131
    %p133 = scmp.ne.s32.totalorder %s124, %s125
    %p134 = scmp.eq.s32.totalorder %s25, 0
    %p135 = por %p133, %p134
    %p136 = scmp.ne.s32.totalorder %s124, %s125
    %p137 = scmp.eq.s32.totalorder %s26, 1
    %p138 = por %p136, %p137
    %p140 = scmp.ne.s32.totalorder %s125, %s139
    %p141 = scmp.eq.s32.totalorder %s26, 0
    %p142 = por %p140, %p141
    %s144 = sadd.s32 %s143, 1
    %p147 = scmp.eq.s32.totalorder %s20, 1
    %p148 = scmp.ne.s32.totalorder %s143, %s145
    %p149 = scmp.eq.s32.totalorder %s20, 0
    %p150 = por %p148, %p149
    %p151 = scmp.ne.s32.totalorder %s143, %s145
    %p152 = scmp.eq.s32.totalorder %s25, 1
    %p153 = por %p151, %p152
    %p154 = scmp.ne.s32.totalorder %s145, %s146
    %p155 = scmp.eq.s32.totalorder %s25, 0
    %p156 = por %p154, %p155
    %p157 = scmp.ne.s32.totalorder %s145, %s146
    %p158 = scmp.eq.s32.totalorder %s26, 1
    %p159 = por %p157, %p158
    %p161 = scmp.ne.s32.totalorder %s146, %s160
    %p162 = scmp.eq.s32.totalorder %s26, 0
    %p163 = por %p161, %p162
    %s165 = sadd.s32 %s164, 1
    %p168 = scmp.eq.s32.totalorder %s20, 1
    %p169 = scmp.ne.s32.totalorder %s164, %s166
    %p170 = scmp.eq.s32.totalorder %s20, 0
    %p171 = por %p169, %p170
    %p172 = scmp.ne.s32.totalorder %s164, %s166
    %p173 = scmp.eq.s32.totalorder %s25, 1
    %p174 = por %p172, %p173
    %p175 = scmp.ne.s32.totalorder %s166, %s167
    %p176 = scmp.eq.s32.totalorder %s25, 0
    %p177 = por %p175, %p176
    %p178 = scmp.ne.s32.totalorder %s166, %s167
    %p179 = scmp.eq.s32.totalorder %s26, 1
    %p180 = por %p178, %p179
    %p182 = scmp.ne.s32.totalorder %s167, %s181
    %p183 = scmp.eq.s32.totalorder %s26, 0
    %p184 = por %p182, %p183
    %s186 = sadd.s32 %s185, 1
    %p189 = scmp.eq.s32.totalorder %s20, 1
    %p190 = scmp.ne.s32.totalorder %s185, %s187
    %p191 = scmp.eq.s32.totalorder %s20, 0
    %p192 = por %p190, %p191
    %p193 = scmp.ne.s32.totalorder %s185, %s187
    %p194 = scmp.eq.s32.totalorder %s25, 1
    %p195 = por %p193, %p194
    %p196 = scmp.ne.s32.totalorder %s187, %s188
    %p197 = scmp.eq.s32.totalorder %s25, 0
    %p198 = por %p196, %p197
    %p199 = scmp.ne.s32.totalorder %s187, %s188
    %p200 = scmp.eq.s32.totalorder %s26, 1
    %p201 = por %p199, %p200
    %p203 = scmp.ne.s32.totalorder %s188, %s202
    %p204 = scmp.eq.s32.totalorder %s26, 0
    %p205 = por %p203, %p204
    %s207 = sadd.s32 %s206, 1
    %p210 = scmp.eq.s32.totalorder %s20, 1
    %p211 = scmp.ne.s32.totalorder %s206, %s208
    %p212 = scmp.eq.s32.totalorder %s20, 0
    %p213 = por %p211, %p212
    %p214 = scmp.ne.s32.totalorder %s206, %s208
    %p215 = scmp.eq.s32.totalorder %s25, 1
    %p216 = por %p214, %p215
    %p217 = scmp.ne.s32.totalorder %s208, %s209
    %p218 = scmp.eq.s32.totalorder %s25, 0
    %p219 = por %p217, %p218
    %p220 = scmp.ne.s32.totalorder %s208, %s209
    %p221 = scmp.eq.s32.totalorder %s26, 1
    %p222 = por %p220, %p221
    %p224 = scmp.ne.s32.totalorder %s209, %s223
    %p225 = scmp.eq.s32.totalorder %s26, 0
    %p226 = por %p224, %p225
    %s228 = sadd.s32 %s227, 1
    %p231 = scmp.eq.s32.totalorder %s20, 1
    %p232 = scmp.ne.s32.totalorder %s227, %s229
    %p233 = scmp.eq.s32.totalorder %s20, 0
    %p234 = por %p232, %p233
    %p235 = scmp.ne.s32.totalorder %s227, %s229
    %p236 = scmp.eq.s32.totalorder %s25, 1
    %p237 = por %p235, %p236
    %p238 = scmp.ne.s32.totalorder %s229, %s230
    %p239 = scmp.eq.s32.totalorder %s25, 0
    %p240 = por %p238, %p239
    %p241 = scmp.ne.s32.totalorder %s229, %s230
    %p242 = scmp.eq.s32.totalorder %s26, 1
    %p243 = por %p241, %p242
    %p245 = scmp.ne.s32.totalorder %s230, %s244
    %p246 = scmp.eq.s32.totalorder %s26, 0
    %p247 = por %p245, %p246
    %s249 = sadd.s32 %s248, 1
    %p252 = scmp.eq.s32.totalorder %s20, 1
    %p253 = scmp.ne.s32.totalorder %s248, %s250
    %p254 = scmp.eq.s32.totalorder %s20, 0
    %p255 = por %p253, %p254
    %p256 = scmp.ne.s32.totalorder %s248, %s250
    %p257 = scmp.eq.s32.totalorder %s25, 1
    %p258 = por %p256, %p257
    %p259 = scmp.ne.s32.totalorder %s250, %s251
    %p260 = scmp.eq.s32.totalorder %s25, 0
    %p261 = por %p259, %p260
    %p262 = scmp.ne.s32.totalorder %s250, %s251
    %p263 = scmp.eq.s32.totalorder %s26, 1
    %p264 = por %p262, %p263
    %p266 = scmp.ne.s32.totalorder %s251, %s265
    %p267 = scmp.eq.s32.totalorder %s26, 0
    %p268 = por %p266, %p267
    %s270 = sadd.s32 %s269, 1
    %p273 = scmp.eq.s32.totalorder %s20, 1
    %p274 = scmp.ne.s32.totalorder %s269, %s271
    %p275 = scmp.eq.s32.totalorder %s20, 0
    %p276 = por %p274, %p275
    %p277 = scmp.ne.s32.totalorder %s269, %s271
    %p278 = scmp.eq.s32.totalorder %s25, 1
    %p279 = por %p277, %p278
    %p280 = scmp.ne.s32.totalorder %s271, %s272
    %p281 = scmp.eq.s32.totalorder %s25, 0
    %p282 = por %p280, %p281
    %p283 = scmp.ne.s32.totalorder %s271, %s272
    %p284 = scmp.eq.s32.totalorder %s26, 1
    %p285 = por %p283, %p284
    %p287 = scmp.ne.s32.totalorder %s272, %s286
    %p288 = scmp.eq.s32.totalorder %s26, 0
    %p289 = por %p287, %p288
    %s291 = sadd.s32 %s290, 1
    %p294 = scmp.eq.s32.totalorder %s20, 1
    %p295 = scmp.ne.s32.totalorder %s290, %s292
    %p296 = scmp.eq.s32.totalorder %s20, 0
    %p297 = por %p295, %p296
    %p298 = scmp.ne.s32.totalorder %s290, %s292
    %p299 = scmp.eq.s32.totalorder %s25, 1
    %p300 = por %p298, %p299
    %p301 = scmp.ne.s32.totalorder %s292, %s293
    %p302 = scmp.eq.s32.totalorder %s25, 0
    %p303 = por %p301, %p302
    %p304 = scmp.ne.s32.totalorder %s292, %s293
    %p305 = scmp.eq.s32.totalorder %s26, 1
    %p306 = por %p304, %p305
    %p308 = scmp.ne.s32.totalorder %s293, %s307
    %p309 = scmp.eq.s32.totalorder %s26, 0
    %p310 = por %p308, %p309
    %s312 = sadd.s32 %s311, 1
    %p315 = scmp.eq.s32.totalorder %s20, 1
    %p316 = scmp.ne.s32.totalorder %s311, %s313
    %p317 = scmp.eq.s32.totalorder %s20, 0
    %p318 = por %p316, %p317
    %p319 = scmp.ne.s32.totalorder %s311, %s313
    %p320 = scmp.eq.s32.totalorder %s25, 1
    %p321 = por %p319, %p320
    %p322 = scmp.ne.s32.totalorder %s313, %s314
    %p323 = scmp.eq.s32.totalorder %s25, 0
    %p324 = por %p322, %p323
    %p325 = scmp.ne.s32.totalorder %s313, %s314
    %p326 = scmp.eq.s32.totalorder %s26, 1
    %p327 = por %p325, %p326
    %p329 = scmp.ne.s32.totalorder %s314, %s328
    %p330 = scmp.eq.s32.totalorder %s26, 0
    %p331 = por %p329, %p330
    %s332 = ssub.s32 %s20, %s27
    %p333 = scmp.eq.s32.totalorder %s332, 0
    %s335 = sadd.s32 %s334, 1
    %s336 = scalar_select %p333, %s334, %s335
    %p339 = pneg %p333
    %p340 = scmp.eq.s32.totalorder %s20, 1
    %p341 = por %p339, %p340
    %p342 = scmp.ne.s32.totalorder %s334, %s337
    %p343 = scmp.eq.s32.totalorder %s20, 0
    %p344 = por %p342, %p343
    %p345 = scmp.ne.s32.totalorder %s334, %s337
    %p346 = scmp.eq.s32.totalorder %s25, 1
    %p347 = por %p345, %p346
    %p348 = scmp.ne.s32.totalorder %s337, %s338
    %p349 = scmp.eq.s32.totalorder %s25, 0
    %p350 = por %p348, %p349
    %p351 = scmp.ne.s32.totalorder %s337, %s338
    %p352 = scmp.eq.s32.totalorder %s26, 1
    %p353 = por %p351, %p352
    %p355 = scmp.ne.s32.totalorder %s338, %s354
    %p356 = scmp.eq.s32.totalorder %s26, 0
    %p357 = por %p355, %p356
    %p358 = scmp.le.s32.totalorder 1, %s20
    %p359 = scmp.lt.s32.totalorder %s20, 3
    %p360 = pnand %p358, %p359
    %p361 = pneg %p360
    // Predicated region
    $region9: #{bert_forward.4} parent=5 // pred_check
      _
    $region10: #{bert_forward.4} parent=5 // pred_check_branch
      %363 = sbr.rel (%p360) target = $region12
    $region11: #{bert_forward.4} parent=5 // pred_region
      %s364 = ssub.s32 %s20, 1
      // Predicated region
      $region13: #{bert_forward.4} parent=11 // pred_check
        %p365 = pneg %p93
      $region14: #{bert_forward.4} parent=11 // pred_check_branch
        %367 = sbr.rel (%p365) target = $region16
      $region15: #{bert_forward.4} parent=11 // pred_region
        _
      $region16: #{bert_forward.4} parent=11 // pred_fallthru
        _
      // Predicated region
      $region17: #{bert_forward.4} parent=11 // pred_check
        %p368 = pneg %p114
      $region18: #{bert_forward.4} parent=11 // pred_check_branch
        %370 = sbr.rel (%p368) target = $region20
      $region19: #{bert_forward.4} parent=11 // pred_region
        _
      $region20: #{bert_forward.4} parent=11 // pred_fallthru
        _
      // Predicated region
      $region21: #{bert_forward.4} parent=11 // pred_check
        %p371 = pneg %p135
      $region22: #{bert_forward.4} parent=11 // pred_check_branch
        %373 = sbr.rel (%p371) target = $region24
      $region23: #{bert_forward.4} parent=11 // pred_region
        _
      $region24: #{bert_forward.4} parent=11 // pred_fallthru
        _
      // Predicated region
      $region25: #{bert_forward.4} parent=11 // pred_check
        %p374 = pneg %p156
      $region26: #{bert_forward.4} parent=11 // pred_check_branch
        %376 = sbr.rel (%p374) target = $region28
      $region27: #{bert_forward.4} parent=11 // pred_region
        _
      $region28: #{bert_forward.4} parent=11 // pred_fallthru
        _
      // Predicated region
      $region29: #{bert_forward.4} parent=11 // pred_check
        %p377 = pneg %p177
      $region30: #{bert_forward.4} parent=11 // pred_check_branch
        %379 = sbr.rel (%p377) target = $region32
      $region31: #{bert_forward.4} parent=11 // pred_region
        _
      $region32: #{bert_forward.4} parent=11 // pred_fallthru
        _
      // Predicated region
      $region33: #{bert_forward.4} parent=11 // pred_check
        %p380 = pneg %p198
      $region34: #{bert_forward.4} parent=11 // pred_check_branch
        %382 = sbr.rel (%p380) target = $region36
      $region35: #{bert_forward.4} parent=11 // pred_region
        _
      $region36: #{bert_forward.4} parent=11 // pred_fallthru
        _
      // Predicated region
      $region37: #{bert_forward.4} parent=11 // pred_check
        %p383 = pneg %p219
      $region38: #{bert_forward.4} parent=11 // pred_check_branch
        %385 = sbr.rel (%p383) target = $region40
      $region39: #{bert_forward.4} parent=11 // pred_region
        _
      $region40: #{bert_forward.4} parent=11 // pred_fallthru
        _
      // Predicated region
      $region41: #{bert_forward.4} parent=11 // pred_check
        %p386 = pneg %p240
      $region42: #{bert_forward.4} parent=11 // pred_check_branch
        %388 = sbr.rel (%p386) target = $region44
      $region43: #{bert_forward.4} parent=11 // pred_region
        _
      $region44: #{bert_forward.4} parent=11 // pred_fallthru
        _
      // Predicated region
      $region45: #{bert_forward.4} parent=11 // pred_check
        %p389 = pneg %p261
      $region46: #{bert_forward.4} parent=11 // pred_check_branch
        %391 = sbr.rel (%p389) target = $region48
      $region47: #{bert_forward.4} parent=11 // pred_region
        _
      $region48: #{bert_forward.4} parent=11 // pred_fallthru
        _
      // Predicated region
      $region49: #{bert_forward.4} parent=11 // pred_check
        %p392 = pneg %p282
      $region50: #{bert_forward.4} parent=11 // pred_check_branch
        %394 = sbr.rel (%p392) target = $region52
      $region51: #{bert_forward.4} parent=11 // pred_region
        _
      $region52: #{bert_forward.4} parent=11 // pred_fallthru
        _
      // Predicated region
      $region53: #{bert_forward.4} parent=11 // pred_check
        %p395 = pneg %p303
      $region54: #{bert_forward.4} parent=11 // pred_check_branch
        %397 = sbr.rel (%p395) target = $region56
      $region55: #{bert_forward.4} parent=11 // pred_region
        _
      $region56: #{bert_forward.4} parent=11 // pred_fallthru
        _
      // Predicated region
      $region57: #{bert_forward.4} parent=11 // pred_check
        %p398 = pneg %p324
      $region58: #{bert_forward.4} parent=11 // pred_check_branch
        %400 = sbr.rel (%p398) target = $region60
      $region59: #{bert_forward.4} parent=11 // pred_region
        _
      $region60: #{bert_forward.4} parent=11 // pred_fallthru
        _
    $region12: #{bert_forward.4} parent=5 // pred_fallthru
      _
    %p401 = scmp.lt.s32.totalorder %s20, 2
    // Predicated region
    $region61: #{bert_forward.4} parent=5 // pred_check
      %p402 = pneg %p401
    $region62: #{bert_forward.4} parent=5 // pred_check_branch
      %404 = sbr.rel (%p402) target = $region64
    $region63: #{bert_forward.4} parent=5 // pred_region
      // Predicated region
      $region65: #{bert_forward.4} parent=63 // pred_check
        %p405 = pneg %p40
      $region66: #{bert_forward.4} parent=63 // pred_check_branch
        %407 = sbr.rel (%p405) target = $region68
      $region67: #{bert_forward.4} parent=63 // pred_region
        %p408 = scmp.lt.s32.totalorder %s20, 1
        %s409 = scalar_select %p408, %s20, 1
        %s410 = smul.addr %s409, 8
        %s411 = scalar_lea.vmem %s0, %s410
      $region68: #{bert_forward.4} parent=63 // pred_fallthru
        _
      // Predicated region
      $region69: #{bert_forward.4} parent=63 // pred_check
        %p412 = pneg %p66
      $region70: #{bert_forward.4} parent=63 // pred_check_branch
        %414 = sbr.rel (%p412) target = $region72
      $region71: #{bert_forward.4} parent=63 // pred_region
        %p415 = scmp.lt.s32.totalorder %s20, 1
        %s416 = scalar_select %p415, %s20, 1
        %s417 = scalar_lea.vmem %s1, %s416
      $region72: #{bert_forward.4} parent=63 // pred_fallthru
        _
    $region64: #{bert_forward.4} parent=5 // pred_fallthru
      _
    %p418 = scmp.le.s32.totalorder 1, %s20
    %p419 = scmp.lt.s32.totalorder %s20, 3
    %p420 = pnand %p418, %p419
    %p421 = pneg %p420
    // Predicated region
    $region73: #{bert_forward.4} parent=5 // pred_check
      _
    $region74: #{bert_forward.4} parent=5 // pred_check_branch
      %423 = sbr.rel (%p420) target = $region76
    $region75: #{bert_forward.4} parent=5 // pred_region
      %s424 = ssub.s32 %s20, 1
      %p425 = scmp.lt.s32.totalorder %s25, 1
      %s426 = scalar_select %p425, %s25, 1
      %s427 = smul.addr %s426, 8
      %s428 = scalar_lea.vmem %s0, %s427
      %p429 = pneg %p46
      %p430 = pneg %p43
      %p431 = scmp.lt.s32.totalorder %s25, 1
      %s432 = scalar_select %p431, %s25, 1
      %s433 = scalar_lea.vmem %s1, %s432
      %p434 = pneg %p72
      %p435 = pneg %p69
      %p436 = pneg %p93
      %p437 = pneg %p90
      %p438 = pneg %p114
      %p439 = pneg %p111
      %p440 = pneg %p135
      %p441 = pneg %p132
      %p442 = pneg %p156
      %p443 = pneg %p153
      %p444 = pneg %p177
      %p445 = pneg %p174
      %p446 = pneg %p198
      %p447 = pneg %p195
      %p448 = pneg %p219
      %p449 = pneg %p216
      %p450 = pneg %p240
      %p451 = pneg %p237
      %p452 = pneg %p261
      %p453 = pneg %p258
      %p454 = pneg %p282
      %p455 = pneg %p279
      %p456 = pneg %p303
      %p457 = pneg %p300
      %p458 = pneg %p324
      %p459 = pneg %p321
      %p460 = pneg %p350
      %p461 = pneg %p347
      %p462 = scmp.lt.s32.totalorder %s25, 1
      %s463 = scalar_select %p462, %s25, 1
      %s464 = smul.addr %s463, 8
      %s465 = scalar_lea.vmem %s14, %s464
      %p466 = scmp.lt.s32.totalorder %s25, 1
      %s467 = scalar_select %p466, %s25, 1
      %s468 = smul.addr %s467, 8
      %s469 = scalar_lea.vmem %s0, %s468
      %p470 = scmp.lt.s32.totalorder %s25, 1
      %s471 = scalar_select %p470, %s25, 1
      %s472 = scalar_lea.vmem %s1, %s471
      %p473 = scmp.lt.s32.totalorder %s25, 1
      %s474 = scalar_select %p473, %s25, 1
      %s475 = smul.addr %s474, 8
      %s476 = scalar_lea.vmem %s14, %s475
      %v478 = vld [vmem:[%s469] sm:$0xff]
      %v479 = vld [vmem:[%s472] sm:$0x1]
      %v480 = vpack.c.bf16 %v478, %v478
      %v481 = vld [vmem:[%s2] sm:$0xf]
      %v482 = vld [vmem:[%s2 + $0x4] sm:$0xf]
      %v483 = vld [vmem:[%s2 + $0x8] sm:$0xf]
      %v484 = vld [vmem:[%s2 + $0xc] sm:$0xf]
      %v485 = vld [vmem:[%s3] sm:$0x1]
      %v487 = vlaneseq
      %v488 = vshrl.u32 %v487, 7
      %v489 = vsub.s32 0, %v488
      %v490 = vrot.slane %v485, %v489
      %v496 = vunpack.c.l.b16 %v481
      %v497 = vunpack.c.l.b16 %v482
      %v498 = vunpack.c.l.b16 %v483
      %v499 = vunpack.c.l.b16 %v484
      %v500 = vpack.c.b16 %v497, %v496
      %v501 = vpack.c.b16 %v499, %v498
      %vm504 = vcmask 261120
      %v506 = vsel %vm504, %v480, 0
      %508 = vmatprep.subr.bf16.mxu0 0
      %509 = vmatpush1.bf16.msra.mxu0 %v500
      %510 = vmatprep.subr.bf16.mxu0 0
      %511 = vmatpush1.bf16.msra.mxu0 %v501
      %512 = vmatprep.subr.bf16.mxu0 0
      %513 = vmatpush1.bf16.msra.mxu0 0
      %514 = vmatprep.subr.bf16.mxu0 0
      %515 = vmatpush1.bf16.msra.mxu0 0
      %516 = vmatprep.subr.bf16.mxu0 0
      %517 = vmatpush1.bf16.msra.mxu0 0
      %518 = vmatprep.subr.bf16.mxu0 0
      %519 = vmatpush1.bf16.msra.mxu0 0
      %520 = vmatprep.subr.bf16.mxu0 0
      %521 = vmatpush1.bf16.msra.mxu0 0
      %522 = vmatprep.subr.bf16.mxu0 0
      %523 = vmatpush1.bf16.msra.mxu0 0
      %524 = vmatprep.subr.bf16.mxu0 0
      %525 = vmatpush1.bf16.msra.mxu0 0
      %526 = vmatprep.subr.bf16.mxu0 0
      %527 = vmatpush1.bf16.msra.mxu0 0
      %528 = vmatprep.subr.bf16.mxu0 0
      %529 = vmatpush1.bf16.msra.mxu0 0
      %530 = vmatprep.subr.bf16.mxu0 0
      %531 = vmatpush1.bf16.msra.mxu0 0
      %532 = vmatprep.subr.bf16.mxu0 0
      %533 = vmatpush1.bf16.msra.mxu0 0
      %534 = vmatprep.subr.bf16.mxu0 0
      %535 = vmatpush1.bf16.msra.mxu0 0
      %536 = vmatprep.subr.bf16.mxu0 0
      %537 = vmatpush1.bf16.msra.mxu0 0
      %538 = vmatprep.subr.bf16.mxu0 0
      %539 = vmatpush1.bf16.msra.mxu0 0
      %540 = vmatprep.mubr.bf16.mxu0 0
      %541 = vmatmul.mubr.bf16.gmra.mrb[0].mxu0 %v506
      %v542 = vpop.f32.mrb[0].mxu0
      %v543 = vadd.f32 %v490, %v542
      %v544 = vpop.f32.mrb[0].mxu0
      %v545 = vpop.f32.mrb[0].mxu0
      %v546 = vpop.f32.mrb[0].mxu0
      %547 = vdwg.mxu0
      %v548 = vpack.c.bf16 %v543, %v543
      %550 = vrot.lane.b32.xlu0 %v548, 96
      %v551 = vpop.permute.xlu0 %550
      %vm552 = vcmask 64512
      %v554 = vsel %vm552, %v548, 0
      %v557 = vsel %vm552, %v551, 0
      %559 = vmatprep.subr.bf16.mxu0 0
      %560 = vmatpush1.bf16.xpose.msra.mxu0 %v557
      %561 = vmatprep.subr.bf16.mxu0 0
      %562 = vmatpush1.bf16.xpose.msra.mxu0 0
      %563 = vmatprep.subr.bf16.mxu0 0
      %564 = vmatpush1.bf16.xpose.msra.mxu0 0
      %565 = vmatprep.subr.bf16.mxu0 0
      %566 = vmatpush1.bf16.xpose.msra.mxu0 0
      %567 = vmatprep.subr.bf16.mxu0 0
      %568 = vmatpush1.bf16.xpose.msra.mxu0 0
      %569 = vmatprep.subr.bf16.mxu0 0
      %570 = vmatpush1.bf16.xpose.msra.mxu0 0
      %571 = vmatprep.subr.bf16.mxu0 0
      %572 = vmatpush1.bf16.xpose.msra.mxu0 0
      %573 = vmatprep.subr.bf16.mxu0 0
      %574 = vmatpush1.bf16.xpose.msra.mxu0 0
      %575 = vmatprep.subr.bf16.mxu0 0
      %576 = vmatpush1.bf16.xpose.msra.mxu0 0
      %577 = vmatprep.subr.bf16.mxu0 0
      %578 = vmatpush1.bf16.xpose.msra.mxu0 0
      %579 = vmatprep.subr.bf16.mxu0 0
      %580 = vmatpush1.bf16.xpose.msra.mxu0 0
      %581 = vmatprep.subr.bf16.mxu0 0
      %582 = vmatpush1.bf16.xpose.msra.mxu0 0
      %583 = vmatprep.subr.bf16.mxu0 0
      %584 = vmatpush1.bf16.xpose.msra.mxu0 0
      %585 = vmatprep.subr.bf16.mxu0 0
      %586 = vmatpush1.bf16.xpose.msra.mxu0 0
      %587 = vmatprep.subr.bf16.mxu0 0
      %588 = vmatpush1.bf16.xpose.msra.mxu0 0
      %589 = vmatprep.subr.bf16.mxu0 0
      %590 = vmatpush1.bf16.xpose.msra.mxu0 0
      %591 = vmatprep.mubr.bf16.mxu0 0
      %592 = vmatmul.mubr.bf16.gmra.mrb[0].mxu0 %v554
      %v593 = vpop.f32.mrb[0].mxu0
      %v594 = vadd.f32 0.0, %v593
      %v595 = vpop.f32.mrb[0].mxu0
      %v596 = vpop.f32.mrb[0].mxu0
      %v597 = vpop.f32.mrb[0].mxu0
      %598 = vdwg.mxu0
      %v599 = vmul.f32 %v594, 0.35355338
      %v601 = vlaneseq
      %v602 = vshrl.u32 %v601, 7
      %v603 = vsub.s32 0, %v602
      %v604 = vrot.slane %v479, %v603
      %v606 = vadd.f32 %v599, %v604
      %v607 = vsel %vm552, %v606, -inf
      %608 = vmax.xlane.f32.xlu0 %v607
      %v609 = vpop.xlane.xlu0 %608
      %v610 = vsub.f32 %v606, %v609
      %v611 = vmul.f32 %v610, 1.442695
      %v612 = vpow.pop %v611
      %v613 = vsel %vm552, %v612, 0.0
      %614 = vadd.xlane.f32.xlu0 %v613
      %v615 = vpop.xlane.xlu0 %614
      %v616 = vrcp.pop %v615
      %v617 = vmul.f32 %v612, %v616
      %v618 = vpack.c.bf16 %v617, %v617
      %619 = vrot.lane.b32.xlu0 %v548, 64
      %v620 = vpop.permute.xlu0 %619
      %v622 = vsel %vm552, %v618, 0
      %vm624 = vcmask 1043456
      %v626 = vsel %vm624, %v620, 0
      %628 = vmatprep.subr.bf16.mxu0 0
      %629 = vmatpush1.bf16.msra.mxu0 %v626
      %630 = vmatprep.subr.bf16.mxu0 0
      %631 = vmatpush1.bf16.msra.mxu0 0
      %632 = vmatprep.subr.bf16.mxu0 0
      %633 = vmatpush1.bf16.msra.mxu0 0
      %634 = vmatprep.subr.bf16.mxu0 0
      %635 = vmatpush1.bf16.msra.mxu0 0
      %636 = vmatprep.subr.bf16.mxu0 0
      %637 = vmatpush1.bf16.msra.mxu0 0
      %638 = vmatprep.subr.bf16.mxu0 0
      %639 = vmatpush1.bf16.msra.mxu0 0
      %640 = vmatprep.subr.bf16.mxu0 0
      %641 = vmatpush1.bf16.msra.mxu0 0
      %642 = vmatprep.subr.bf16.mxu0 0
      %643 = vmatpush1.bf16.msra.mxu0 0
      %644 = vmatprep.subr.bf16.mxu0 0
      %645 = vmatpush1.bf16.msra.mxu0 0
      %646 = vmatprep.subr.bf16.mxu0 0
      %647 = vmatpush1.bf16.msra.mxu0 0
      %648 = vmatprep.subr.bf16.mxu0 0
      %649 = vmatpush1.bf16.msra.mxu0 0
      %650 = vmatprep.subr.bf16.mxu0 0
      %651 = vmatpush1.bf16.msra.mxu0 0
      %652 = vmatprep.subr.bf16.mxu0 0
      %653 = vmatpush1.bf16.msra.mxu0 0
      %654 = vmatprep.subr.bf16.mxu0 0
      %655 = vmatpush1.bf16.msra.mxu0 0
      %656 = vmatprep.subr.bf16.mxu0 0
      %657 = vmatpush1.bf16.msra.mxu0 0
      %658 = vmatprep.subr.bf16.mxu0 0
      %659 = vmatpush1.bf16.msra.mxu0 0
      %660 = vmatprep.mubr.bf16.mxu0 0
      %661 = vmatmul.mubr.bf16.gmra.mrb[0].mxu0 %v622
      %v662 = vpop.f32.mrb[0].mxu0
      %v663 = vadd.f32 0.0, %v662
      %v664 = vpop.f32.mrb[0].mxu0
      %v665 = vpop.f32.mrb[0].mxu0
      %v666 = vpop.f32.mrb[0].mxu0
      %667 = vdwg.mxu0
      %668 = vrot.lane.b32.xlu0 %v548, 120
      %v669 = vpop.permute.xlu0 %668
      %670 = vrot.lane.b32.xlu0 %v548, 88
      %v671 = vpop.permute.xlu0 %670
      %v673 = vsel %vm552, %v669, 0
      %v676 = vsel %vm552, %v671, 0
      %678 = vmatprep.subr.bf16.mxu0 0
      %679 = vmatpush1.bf16.xpose.msra.mxu0 %v676
      %680 = vmatprep.subr.bf16.mxu0 0
      %681 = vmatpush1.bf16.xpose.msra.mxu0 0
      %682 = vmatprep.subr.bf16.mxu0 0
      %683 = vmatpush1.bf16.xpose.msra.mxu0 0
      %684 = vmatprep.subr.bf16.mxu0 0
      %685 = vmatpush1.bf16.xpose.msra.mxu0 0
      %686 = vmatprep.subr.bf16.mxu0 0
      %687 = vmatpush1.bf16.xpose.msra.mxu0 0
      %688 = vmatprep.subr.bf16.mxu0 0
      %689 = vmatpush1.bf16.xpose.msra.mxu0 0
      %690 = vmatprep.subr.bf16.mxu0 0
      %691 = vmatpush1.bf16.xpose.msra.mxu0 0
      %692 = vmatprep.subr.bf16.mxu0 0
      %693 = vmatpush1.bf16.xpose.msra.mxu0 0
      %694 = vmatprep.subr.bf16.mxu0 0
      %695 = vmatpush1.bf16.xpose.msra.mxu0 0
      %696 = vmatprep.subr.bf16.mxu0 0
      %697 = vmatpush1.bf16.xpose.msra.mxu0 0
      %698 = vmatprep.subr.bf16.mxu0 0
      %699 = vmatpush1.bf16.xpose.msra.mxu0 0
      %700 = vmatprep.subr.bf16.mxu0 0
      %701 = vmatpush1.bf16.xpose.msra.mxu0 0
      %702 = vmatprep.subr.bf16.mxu0 0
      %703 = vmatpush1.bf16.xpose.msra.mxu0 0
      %704 = vmatprep.subr.bf16.mxu0 0
      %705 = vmatpush1.bf16.xpose.msra.mxu0 0
      %706 = vmatprep.subr.bf16.mxu0 0
      %707 = vmatpush1.bf16.xpose.msra.mxu0 0
      %708 = vmatprep.subr.bf16.mxu0 0
      %709 = vmatpush1.bf16.xpose.msra.mxu0 0
      %710 = vmatprep.mubr.bf16.mxu0 0
      %711 = vmatmul.mubr.bf16.gmra.mrb[0].mxu0 %v673
      %v712 = vpop.f32.mrb[0].mxu0
      %v713 = vadd.f32 0.0, %v712
      %v714 = vpop.f32.mrb[0].mxu0
      %v715 = vpop.f32.mrb[0].mxu0
      %v716 = vpop.f32.mrb[0].mxu0
      %717 = vdwg.mxu0
      %v718 = vmul.f32 %v713, 0.35355338
      %v719 = vadd.f32 %v718, %v604
      %v720 = vsel %vm552, %v719, -inf
      %721 = vmax.xlane.f32.xlu0 %v720
      %v722 = vpop.xlane.xlu0 %721
      %v723 = vsub.f32 %v719, %v722
      %v724 = vmul.f32 %v723, 1.442695
      %v725 = vpow.pop %v724
      %v726 = vsel %vm552, %v725, 0.0
      %727 = vadd.xlane.f32.xlu0 %v726
      %v728 = vpop.xlane.xlu0 %727
      %v729 = vrcp.pop %v728
      %v730 = vmul.f32 %v725, %v729
      %v731 = vpack.c.bf16 %v730, %v730
      %732 = vrot.lane.b32.xlu0 %v548, 56
      %v733 = vpop.permute.xlu0 %732
      %v735 = vsel %vm552, %v731, 0
      %v738 = vsel %vm624, %v733, 0
      %740 = vmatprep.subr.bf16.mxu0 0
      %741 = vmatpush1.bf16.msra.mxu0 %v738
      %742 = vmatprep.subr.bf16.mxu0 0
      %743 = vmatpush1.bf16.msra.mxu0 0
      %744 = vmatprep.subr.bf16.mxu0 0
      %745 = vmatpush1.bf16.msra.mxu0 0
      %746 = vmatprep.subr.bf16.mxu0 0
      %747 = vmatpush1.bf16.msra.mxu0 0
      %748 = vmatprep.subr.bf16.mxu0 0
      %749 = vmatpush1.bf16.msra.mxu0 0
      %750 = vmatprep.subr.bf16.mxu0 0
      %751 = vmatpush1.bf16.msra.mxu0 0
      %752 = vmatprep.subr.bf16.mxu0 0
      %753 = vmatpush1.bf16.msra.mxu0 0
      %754 = vmatprep.subr.bf16.mxu0 0
      %755 = vmatpush1.bf16.msra.mxu0 0
      %756 = vmatprep.subr.bf16.mxu0 0
      %757 = vmatpush1.bf16.msra.mxu0 0
      %758 = vmatprep.subr.bf16.mxu0 0
      %759 = vmatpush1.bf16.msra.mxu0 0
      %760 = vmatprep.subr.bf16.mxu0 0
      %761 = vmatpush1.bf16.msra.mxu0 0
      %762 = vmatprep.subr.bf16.mxu0 0
      %763 = vmatpush1.bf16.msra.mxu0 0
      %764 = vmatprep.subr.bf16.mxu0 0
      %765 = vmatpush1.bf16.msra.mxu0 0
      %766 = vmatprep.subr.bf16.mxu0 0
      %767 = vmatpush1.bf16.msra.mxu0 0
      %768 = vmatprep.subr.bf16.mxu0 0
      %769 = vmatpush1.bf16.msra.mxu0 0
      %770 = vmatprep.subr.bf16.mxu0 0
      %771 = vmatpush1.bf16.msra.mxu0 0
      %772 = vmatprep.mubr.bf16.mxu0 0
      %773 = vmatmul.mubr.bf16.gmra.mrb[0].mxu0 %v735
      %v774 = vpop.f32.mrb[0].mxu0
      %v775 = vadd.f32 0.0, %v774
      %v776 = vpop.f32.mrb[0].mxu0
      %v777 = vpop.f32.mrb[0].mxu0
      %v778 = vpop.f32.mrb[0].mxu0
      %779 = vdwg.mxu0
      %780 = vrot.lane.b32.xlu0 %v548, 112
      %v781 = vpop.permute.xlu0 %780
      %782 = vrot.lane.b32.xlu0 %v548, 80
      %v783 = vpop.permute.xlu0 %782
      %v785 = vsel %vm552, %v781, 0
      %v788 = vsel %vm552, %v783, 0
      %790 = vmatprep.subr.bf16.mxu0 0
      %791 = vmatpush1.bf16.xpose.msra.mxu0 %v788
      %792 = vmatprep.subr.bf16.mxu0 0
      %793 = vmatpush1.bf16.xpose.msra.mxu0 0
      %794 = vmatprep.subr.bf16.mxu0 0
      %795 = vmatpush1.bf16.xpose.msra.mxu0 0
      %796 = vmatprep.subr.bf16.mxu0 0
      %797 = vmatpush1.bf16.xpose.msra.mxu0 0
      %798 = vmatprep.subr.bf16.mxu0 0
      %799 = vmatpush1.bf16.xpose.msra.mxu0 0
      %800 = vmatprep.subr.bf16.mxu0 0
      %801 = vmatpush1.bf16.xpose.msra.mxu0 0
      %802 = vmatprep.subr.bf16.mxu0 0
      %803 = vmatpush1.bf16.xpose.msra.mxu0 0
      %804 = vmatprep.subr.bf16.mxu0 0
      %805 = vmatpush1.bf16.xpose.msra.mxu0 0
      %806 = vmatprep.subr.bf16.mxu0 0
      %807 = vmatpush1.bf16.xpose.msra.mxu0 0
      %808 = vmatprep.subr.bf16.mxu0 0
      %809 = vmatpush1.bf16.xpose.msra.mxu0 0
      %810 = vmatprep.subr.bf16.mxu0 0
      %811 = vmatpush1.bf16.xpose.msra.mxu0 0
      %812 = vmatprep.subr.bf16.mxu0 0
      %813 = vmatpush1.bf16.xpose.msra.mxu0 0
      %814 = vmatprep.subr.bf16.mxu0 0
      %815 = vmatpush1.bf16.xpose.msra.mxu0 0
      %816 = vmatprep.subr.bf16.mxu0 0
      %817 = vmatpush1.bf16.xpose.msra.mxu0 0
      %818 = vmatprep.subr.bf16.mxu0 0
      %819 = vmatpush1.bf16.xpose.msra.mxu0 0
      %820 = vmatprep.subr.bf16.mxu0 0
      %821 = vmatpush1.bf16.xpose.msra.mxu0 0
      %822 = vmatprep.mubr.bf16.mxu0 0
      %823 = vmatmul.mubr.bf16.gmra.mrb[0].mxu0 %v785
      %v824 = vpop.f32.mrb[0].mxu0
      %v825 = vadd.f32 0.0, %v824
      %v826 = vpop.f32.mrb[0].mxu0
      %v827 = vpop.f32.mrb[0].mxu0
      %v828 = vpop.f32.mrb[0].mxu0
      %829 = vdwg.mxu0
      %v830 = vmul.f32 %v825, 0.35355338
      %v831 = vadd.f32 %v830, %v604
      %v832 = vsel %vm552, %v831, -inf
      %833 = vmax.xlane.f32.xlu0 %v832
      %v834 = vpop.xlane.xlu0 %833
      %v835 = vsub.f32 %v831, %v834
      %v836 = vmul.f32 %v835, 1.442695
      %v837 = vpow.pop %v836
      %v838 = vsel %vm552, %v837, 0.0
      %839 = vadd.xlane.f32.xlu0 %v838
      %v840 = vpop.xlane.xlu0 %839
      %v841 = vrcp.pop %v840
      %v842 = vmul.f32 %v837, %v841
      %v843 = vpack.c.bf16 %v842, %v842
      %844 = vrot.lane.b32.xlu0 %v548, 48
      %v845 = vpop.permute.xlu0 %844
      %v847 = vsel %vm552, %v843, 0
      %v850 = vsel %vm624, %v845, 0
      %852 = vmatprep.subr.bf16.mxu0 0
      %853 = vmatpush1.bf16.msra.mxu0 %v850
      %854 = vmatprep.subr.bf16.mxu0 0
      %855 = vmatpush1.bf16.msra.mxu0 0
      %856 = vmatprep.subr.bf16.mxu0 0
      %857 = vmatpush1.bf16.msra.mxu0 0
      %858 = vmatprep.subr.bf16.mxu0 0
      %859 = vmatpush1.bf16.msra.mxu0 0
      %860 = vmatprep.subr.bf16.mxu0 0
      %861 = vmatpush1.bf16.msra.mxu0 0
      %862 = vmatprep.subr.bf16.mxu0 0
      %863 = vmatpush1.bf16.msra.mxu0 0
      %864 = vmatprep.subr.bf16.mxu0 0
      %865 = vmatpush1.bf16.msra.mxu0 0
      %866 = vmatprep.subr.bf16.mxu0 0
      %867 = vmatpush1.bf16.msra.mxu0 0
      %868 = vmatprep.subr.bf16.mxu0 0
      %869 = vmatpush1.bf16.msra.mxu0 0
      %870 = vmatprep.subr.bf16.mxu0 0
      %871 = vmatpush1.bf16.msra.mxu0 0
      %872 = vmatprep.subr.bf16.mxu0 0
      %873 = vmatpush1.bf16.msra.mxu0 0
      %874 = vmatprep.subr.bf16.mxu0 0
      %875 = vmatpush1.bf16.msra.mxu0 0
      %876 = vmatprep.subr.bf16.mxu0 0
      %877 = vmatpush1.bf16.msra.mxu0 0
      %878 = vmatprep.subr.bf16.mxu0 0
      %879 = vmatpush1.bf16.msra.mxu0 0
      %880 = vmatprep.subr.bf16.mxu0 0
      %881 = vmatpush1.bf16.msra.mxu0 0
      %882 = vmatprep.subr.bf16.mxu0 0
      %883 = vmatpush1.bf16.msra.mxu0 0
      %884 = vmatprep.mubr.bf16.mxu0 0
      %885 = vmatmul.mubr.bf16.gmra.mrb[0].mxu0 %v847
      %v886 = vpop.f32.mrb[0].mxu0
      %v887 = vadd.f32 0.0, %v886
      %v888 = vpop.f32.mrb[0].mxu0
      %v889 = vpop.f32.mrb[0].mxu0
      %v890 = vpop.f32.mrb[0].mxu0
      %891 = vdwg.mxu0
      %892 = vrot.lane.b32.xlu0 %v548, 104
      %v893 = vpop.permute.xlu0 %892
      %894 = vrot.lane.b32.xlu0 %v548, 72
      %v895 = vpop.permute.xlu0 %894
      %v897 = vsel %vm552, %v893, 0
      %v900 = vsel %vm552, %v895, 0
      %902 = vmatprep.subr.bf16.mxu0 0
      %903 = vmatpush1.bf16.xpose.msra.mxu0 %v900
      %904 = vmatprep.subr.bf16.mxu0 0
      %905 = vmatpush1.bf16.xpose.msra.mxu0 0
      %906 = vmatprep.subr.bf16.mxu0 0
      %907 = vmatpush1.bf16.xpose.msra.mxu0 0
      %908 = vmatprep.subr.bf16.mxu0 0
      %909 = vmatpush1.bf16.xpose.msra.mxu0 0
      %910 = vmatprep.subr.bf16.mxu0 0
      %911 = vmatpush1.bf16.xpose.msra.mxu0 0
      %912 = vmatprep.subr.bf16.mxu0 0
      %913 = vmatpush1.bf16.xpose.msra.mxu0 0
      %914 = vmatprep.subr.bf16.mxu0 0
      %915 = vmatpush1.bf16.xpose.msra.mxu0 0
      %916 = vmatprep.subr.bf16.mxu0 0
      %917 = vmatpush1.bf16.xpose.msra.mxu0 0
      %918 = vmatprep.subr.bf16.mxu0 0
      %919 = vmatpush1.bf16.xpose.msra.mxu0 0
      %920 = vmatprep.subr.bf16.mxu0 0
      %921 = vmatpush1.bf16.xpose.msra.mxu0 0
      %922 = vmatprep.subr.bf16.mxu0 0
      %923 = vmatpush1.bf16.xpose.msra.mxu0 0
      %924 = vmatprep.subr.bf16.mxu0 0
      %925 = vmatpush1.bf16.xpose.msra.mxu0 0
      %926 = vmatprep.subr.bf16.mxu0 0
      %927 = vmatpush1.bf16.xpose.msra.mxu0 0
      %928 = vmatprep.subr.bf16.mxu0 0
      %929 = vmatpush1.bf16.xpose.msra.mxu0 0
      %930 = vmatprep.subr.bf16.mxu0 0
      %931 = vmatpush1.bf16.xpose.msra.mxu0 0
      %932 = vmatprep.subr.bf16.mxu0 0
      %933 = vmatpush1.bf16.xpose.msra.mxu0 0
      %934 = vmatprep.mubr.bf16.mxu0 0
      %935 = vmatmul.mubr.bf16.gmra.mrb[0].mxu0 %v897
      %v936 = vpop.f32.mrb[0].mxu0
      %v937 = vadd.f32 0.0, %v936
      %v938 = vpop.f32.mrb[0].mxu0
      %v939 = vpop.f32.mrb[0].mxu0
      %v940 = vpop.f32.mrb[0].mxu0
      %941 = vdwg.mxu0
      %v942 = vmul.f32 %v937, 0.35355338
      %v943 = vadd.f32 %v942, %v604
      %v944 = vsel %vm552, %v943, -inf
      %945 = vmax.xlane.f32.xlu0 %v944
      %v946 = vpop.xlane.xlu0 %945
      %v947 = vsub.f32 %v943, %v946
      %v948 = vmul.f32 %v947, 1.442695
      %v949 = vpow.pop %v948
      %v950 = vsel %vm552, %v949, 0.0
      %951 = vadd.xlane.f32.xlu0 %v950
      %v952 = vpop.xlane.xlu0 %951
      %v953 = vrcp.pop %v952
      %v954 = vmul.f32 %v949, %v953
      %v955 = vpack.c.bf16 %v954, %v954
      %956 = vrot.lane.b32.xlu0 %v548, 40
      %v957 = vpop.permute.xlu0 %956
      %v959 = vsel %vm552, %v955, 0
      %v962 = vsel %vm624, %v957, 0
      %964 = vmatprep.subr.bf16.mxu0 0
      %965 = vmatpush1.bf16.msra.mxu0 %v962
      %966 = vmatprep.subr.bf16.mxu0 0
      %967 = vmatpush1.bf16.msra.mxu0 0
      %968 = vmatprep.subr.bf16.mxu0 0
      %969 = vmatpush1.bf16.msra.mxu0 0
      %970 = vmatprep.subr.bf16.mxu0 0
      %971 = vmatpush1.bf16.msra.mxu0 0
      %972 = vmatprep.subr.bf16.mxu0 0
      %973 = vmatpush1.bf16.msra.mxu0 0
      %974 = vmatprep.subr.bf16.mxu0 0
      %975 = vmatpush1.bf16.msra.mxu0 0
      %976 = vmatprep.subr.bf16.mxu0 0
      %977 = vmatpush1.bf16.msra.mxu0 0
      %978 = vmatprep.subr.bf16.mxu0 0
      %979 = vmatpush1.bf16.msra.mxu0 0
      %980 = vmatprep.subr.bf16.mxu0 0
      %981 = vmatpush1.bf16.msra.mxu0 0
      %982 = vmatprep.subr.bf16.mxu0 0
      %983 = vmatpush1.bf16.msra.mxu0 0
      %984 = vmatprep.subr.bf16.mxu0 0
      %985 = vmatpush1.bf16.msra.mxu0 0
      %986 = vmatprep.subr.bf16.mxu0 0
      %987 = vmatpush1.bf16.msra.mxu0 0
      %988 = vmatprep.subr.bf16.mxu0 0
      %989 = vmatpush1.bf16.msra.mxu0 0
      %990 = vmatprep.subr.bf16.mxu0 0
      %991 = vmatpush1.bf16.msra.mxu0 0
      %992 = vmatprep.subr.bf16.mxu0 0
      %993 = vmatpush1.bf16.msra.mxu0 0
      %994 = vmatprep.subr.bf16.mxu0 0
      %995 = vmatpush1.bf16.msra.mxu0 0
      %996 = vmatprep.mubr.bf16.mxu0 0
      %997 = vmatmul.mubr.bf16.gmra.mrb[0].mxu0 %v959
      %v998 = vpop.f32.mrb[0].mxu0
      %v999 = vadd.f32 0.0, %v998
      %v1000 = vpop.f32.mrb[0].mxu0
      %v1001 = vpop.f32.mrb[0].mxu0
      %v1002 = vpop.f32.mrb[0].mxu0
      %1003 = vdwg.mxu0
      %1005 = vrot.lane.b32.xlu0 %v775, 8
      %v1006 = vpop.permute.xlu0 %1005
      %1009 = vrot.lane.b32.xlu0 %v887, 16
      %v1010 = vpop.permute.xlu0 %1009
      %1013 = vrot.lane.b32.xlu0 %v999, 24
      %v1014 = vpop.permute.xlu0 %1013
      %v1016 = vsel %vm552, %v663, %v1006
      %vm1017 = vcmask 130048
      %v1018 = vsel %vm1017, %v1016, %v1010
      %vm1019 = vcmask 195584
      %v1020 = vsel %vm1019, %v1018, %v1014
      %v1021 = vpack.c.bf16 %v1020, %v1020
      %v1022 = vld [vmem:[%s4] sm:$0xf]
      %v1023 = vld [vmem:[%s4 + $0x4] sm:$0xf]
      %v1024 = vld [vmem:[%s4 + $0x8] sm:$0xf]
      %v1025 = vld [vmem:[%s4 + $0xc] sm:$0xf]
      %v1026 = vld [vmem:[%s5] sm:$0x1]
      %v1028 = vlaneseq
      %v1029 = vshrl.u32 %v1028, 7
      %v1030 = vsub.s32 0, %v1029
      %v1031 = vrot.slane %v1026, %v1030
      %v1037 = vunpack.c.l.b16 %v1022
      %v1038 = vunpack.c.l.b16 %v1023
      %v1039 = vunpack.c.l.b16 %v1024
      %v1040 = vunpack.c.l.b16 %v1025
      %v1041 = vpack.c.b16 %v1038, %v1037
      %v1042 = vpack.c.b16 %v1040, %v1039
      %v1046 = vsel %vm504, %v1021, 0
      %1048 = vmatprep.subr.bf16.mxu0 0
      %1049 = vmatpush1.bf16.msra.mxu0 %v1041
      %1050 = vmatprep.subr.bf16.mxu0 0
      %1051 = vmatpush1.bf16.msra.mxu0 %v1042
      %1052 = vmatprep.subr.bf16.mxu0 0
      %1053 = vmatpush1.bf16.msra.mxu0 0
      %1054 = vmatprep.subr.bf16.mxu0 0
      %1055 = vmatpush1.bf16.msra.mxu0 0
      %1056 = vmatprep.subr.bf16.mxu0 0
      %1057 = vmatpush1.bf16.msra.mxu0 0
      %1058 = vmatprep.subr.bf16.mxu0 0
      %1059 = vmatpush1.bf16.msra.mxu0 0
      %1060 = vmatprep.subr.bf16.mxu0 0
      %1061 = vmatpush1.bf16.msra.mxu0 0
      %1062 = vmatprep.subr.bf16.mxu0 0
      %1063 = vmatpush1.bf16.msra.mxu0 0
      %1064 = vmatprep.subr.bf16.mxu0 0
      %1065 = vmatpush1.bf16.msra.mxu0 0
      %1066 = vmatprep.subr.bf16.mxu0 0
      %1067 = vmatpush1.bf16.msra.mxu0 0
      %1068 = vmatprep.subr.bf16.mxu0 0
      %1069 = vmatpush1.bf16.msra.mxu0 0
      %1070 = vmatprep.subr.bf16.mxu0 0
      %1071 = vmatpush1.bf16.msra.mxu0 0
      %1072 = vmatprep.subr.bf16.mxu0 0
      %1073 = vmatpush1.bf16.msra.mxu0 0
      %1074 = vmatprep.subr.bf16.mxu0 0
      %1075 = vmatpush1.bf16.msra.mxu0 0
      %1076 = vmatprep.subr.bf16.mxu0 0
      %1077 = vmatpush1.bf16.msra.mxu0 0
      %1078 = vmatprep.subr.bf16.mxu0 0
      %1079 = vmatpush1.bf16.msra.mxu0 0
      %1080 = vmatprep.mubr.bf16.mxu0 0
      %1081 = vmatmul.mubr.bf16.gmra.mrb[0].mxu0 %v1046
      %v1082 = vpop.f32.mrb[0].mxu0
      %v1083 = vadd.f32 %v1031, %v1082
      %v1084 = vpop.f32.mrb[0].mxu0
      %v1085 = vpop.f32.mrb[0].mxu0
      %v1086 = vpop.f32.mrb[0].mxu0
      %1087 = vdwg.mxu0
      %v1088 = vadd.f32 %v1083, %v478
      %v1089 = vld [vmem:[%s6] sm:$0x1]
      %v1090 = vld [vmem:[%s7] sm:$0x1]
      %v1091 = vsel %vm504, %v1088, 0.0
      %1092 = vadd.xlane.f32.xlu0 %v1091
      %v1093 = vpop.xlane.xlu0 %1092
      %v1094 = vrcp.pop 32.0
      %v1095 = vmul.f32 %v1093, %v1094
      %v1096 = vsub.f32 %v1088, %v1095
      %v1097 = vmul.f32 %v1096, %v1096
      %v1098 = vsel %vm504, %v1097, 0.0
      %1099 = vadd.xlane.f32.xlu0 %v1098
      %v1100 = vpop.xlane.xlu0 %1099
      %v1101 = vmul.f32 %v1100, %v1094
      %v1102 = vadd.f32 %v1101, 1e-12
      %v1103 = vrsqrt.pop %v1102
      %v1104 = vmul.f32 %v1096, %v1103
      %v1106 = vlaneseq
      %v1107 = vshrl.u32 %v1106, 7
      %v1108 = vsub.s32 0, %v1107
      %v1109 = vrot.slane %v1089, %v1108
      %v1111 = vmul.f32 %v1104, %v1109
      %v1113 = vlaneseq
      %v1114 = vshrl.u32 %v1113, 7
      %v1115 = vsub.s32 0, %v1114
      %v1116 = vrot.slane %v1090, %v1115
      %v1118 = vadd.f32 %v1111, %v1116
      %v1119 = vpack.c.bf16 %v1118, %v1118
      %v1120 = vld [vmem:[%s8] sm:$0xf]
      %v1121 = vld [vmem:[%s8 + $0x4] sm:$0xf]
      %v1122 = vld [vmem:[%s8 + $0x8] sm:$0xf]
      %v1123 = vld [vmem:[%s8 + $0xc] sm:$0xf]
      %v1124 = vld [vmem:[%s9] sm:$0x1]
      %v1126 = vlaneseq
      %v1127 = vshrl.u32 %v1126, 7
      %v1128 = vsub.s32 0, %v1127
      %v1129 = vrot.slane %v1124, %v1128
      %v1135 = vunpack.c.l.b16 %v1120
      %v1136 = vunpack.c.l.b16 %v1121
      %v1137 = vunpack.c.l.b16 %v1122
      %v1138 = vunpack.c.l.b16 %v1123
      %v1139 = vpack.c.b16 %v1136, %v1135
      %v1140 = vpack.c.b16 %v1138, %v1137
      %v1144 = vsel %vm504, %v1119, 0
      %1146 = vmatprep.subr.bf16.mxu0 0
      %1147 = vmatpush1.bf16.msra.mxu0 %v1139
      %1148 = vmatprep.subr.bf16.mxu0 0
      %1149 = vmatpush1.bf16.msra.mxu0 %v1140
      %1150 = vmatprep.subr.bf16.mxu0 0
      %1151 = vmatpush1.bf16.msra.mxu0 0
      %1152 = vmatprep.subr.bf16.mxu0 0
      %1153 = vmatpush1.bf16.msra.mxu0 0
      %1154 = vmatprep.subr.bf16.mxu0 0
      %1155 = vmatpush1.bf16.msra.mxu0 0
      %1156 = vmatprep.subr.bf16.mxu0 0
      %1157 = vmatpush1.bf16.msra.mxu0 0
      %1158 = vmatprep.subr.bf16.mxu0 0
      %1159 = vmatpush1.bf16.msra.mxu0 0
      %1160 = vmatprep.subr.bf16.mxu0 0
      %1161 = vmatpush1.bf16.msra.mxu0 0
      %1162 = vmatprep.subr.bf16.mxu0 0
      %1163 = vmatpush1.bf16.msra.mxu0 0
      %1164 = vmatprep.subr.bf16.mxu0 0
      %1165 = vmatpush1.bf16.msra.mxu0 0
      %1166 = vmatprep.subr.bf16.mxu0 0
      %1167 = vmatpush1.bf16.msra.mxu0 0
      %1168 = vmatprep.subr.bf16.mxu0 0
      %1169 = vmatpush1.bf16.msra.mxu0 0
      %1170 = vmatprep.subr.bf16.mxu0 0
      %1171 = vmatpush1.bf16.msra.mxu0 0
      %1172 = vmatprep.subr.bf16.mxu0 0
      %1173 = vmatpush1.bf16.msra.mxu0 0
      %1174 = vmatprep.subr.bf16.mxu0 0
      %1175 = vmatpush1.bf16.msra.mxu0 0
      %1176 = vmatprep.subr.bf16.mxu0 0
      %1177 = vmatpush1.bf16.msra.mxu0 0
      %1178 = vmatprep.mubr.bf16.mxu0 0
      %1179 = vmatmul.mubr.bf16.gmra.mrb[0].mxu0 %v1144
      %v1180 = vpop.f32.mrb[0].mxu0
      %v1181 = vadd.f32 %v1129, %v1180
      %v1182 = vpop.f32.mrb[0].mxu0
      %v1183 = vpop.f32.mrb[0].mxu0
      %v1184 = vpop.f32.mrb[0].mxu0
      %1185 = vdwg.mxu0
      %v1186 = vmul.f32 %v1181, 0.5
      %v1187 = vmul.f32 %v1181, 0.044715
      %v1188 = vmul.f32 %v1187, %v1181
      %v1189 = vmul.f32 %v1188, %v1181
      %v1190 = vadd.f32 %v1181, %v1189
      %v1191 = vmul.f32 %v1190, 0.7978846
      %v1192 = vtanh.pop %v1191
      %v1193 = vadd.f32 %v1192, 1.0
      %v1194 = vmul.f32 %v1186, %v1193
      %v1195 = vpack.c.bf16 %v1194, %v1194
      %v1196 = vld [vmem:[%s10] sm:$0xf]
      %v1197 = vld [vmem:[%s10 + $0x4] sm:$0xf]
      %v1198 = vld [vmem:[%s10 + $0x8] sm:$0xf]
      %v1199 = vld [vmem:[%s10 + $0xc] sm:$0xf]
      %v1200 = vld [vmem:[%s10 + $0x10] sm:$0xf]
      %v1201 = vld [vmem:[%s10 + $0x14] sm:$0xf]
      %v1202 = vld [vmem:[%s10 + $0x18] sm:$0xf]
      %v1203 = vld [vmem:[%s10 + $0x1c] sm:$0xf]
      %v1204 = vld [vmem:[%s11] sm:$0x1]
      %v1206 = vlaneseq
      %v1207 = vshrl.u32 %v1206, 7
      %v1208 = vsub.s32 0, %v1207
      %v1209 = vrot.slane %v1204, %v1208
      %v1219 = vunpack.c.l.b16 %v1196
      %v1220 = vunpack.c.l.b16 %v1197
      %v1221 = vunpack.c.l.b16 %v1198
      %v1222 = vunpack.c.l.b16 %v1199
      %v1223 = vunpack.c.l.b16 %v1200
      %v1224 = vunpack.c.l.b16 %v1201
      %v1225 = vunpack.c.l.b16 %v1202
      %v1226 = vunpack.c.l.b16 %v1203
      %v1227 = vpack.c.b16 %v1220, %v1219
      %v1228 = vpack.c.b16 %v1222, %v1221
      %v1229 = vpack.c.b16 %v1224, %v1223
      %v1230 = vpack.c.b16 %v1226, %v1225
      %vm1235 = vcmask 523264
      %v1237 = vsel %vm1235, %v1195, 0
      %1239 = vmatprep.subr.bf16.mxu0 0
      %1240 = vmatpush1.bf16.msra.mxu0 %v1227
      %1241 = vmatprep.subr.bf16.mxu0 0
      %1242 = vmatpush1.bf16.msra.mxu0 %v1228
      %1243 = vmatprep.subr.bf16.mxu0 0
      %1244 = vmatpush1.bf16.msra.mxu0 %v1229
      %1245 = vmatprep.subr.bf16.mxu0 0
      %1246 = vmatpush1.bf16.msra.mxu0 %v1230
      %1247 = vmatprep.subr.bf16.mxu0 0
      %1248 = vmatpush1.bf16.msra.mxu0 0
      %1249 = vmatprep.subr.bf16.mxu0 0
      %1250 = vmatpush1.bf16.msra.mxu0 0
      %1251 = vmatprep.subr.bf16.mxu0 0
      %1252 = vmatpush1.bf16.msra.mxu0 0
      %1253 = vmatprep.subr.bf16.mxu0 0
      %1254 = vmatpush1.bf16.msra.mxu0 0
      %1255 = vmatprep.subr.bf16.mxu0 0
      %1256 = vmatpush1.bf16.msra.mxu0 0
      %1257 = vmatprep.subr.bf16.mxu0 0
      %1258 = vmatpush1.bf16.msra.mxu0 0
      %1259 = vmatprep.subr.bf16.mxu0 0
      %1260 = vmatpush1.bf16.msra.mxu0 0
      %1261 = vmatprep.subr.bf16.mxu0 0
      %1262 = vmatpush1.bf16.msra.mxu0 0
      %1263 = vmatprep.subr.bf16.mxu0 0
      %1264 = vmatpush1.bf16.msra.mxu0 0
      %1265 = vmatprep.subr.bf16.mxu0 0
      %1266 = vmatpush1.bf16.msra.mxu0 0
      %1267 = vmatprep.subr.bf16.mxu0 0
      %1268 = vmatpush1.bf16.msra.mxu0 0
      %1269 = vmatprep.subr.bf16.mxu0 0
      %1270 = vmatpush1.bf16.msra.mxu0 0
      %1271 = vmatprep.mubr.bf16.mxu0 0
      %1272 = vmatmul.mubr.bf16.gmra.mrb[0].mxu0 %v1237
      %v1273 = vpop.f32.mrb[0].mxu0
      %v1274 = vadd.f32 %v1209, %v1273
      %v1275 = vpop.f32.mrb[0].mxu0
      %v1276 = vpop.f32.mrb[0].mxu0
      %v1277 = vpop.f32.mrb[0].mxu0
      %1278 = vdwg.mxu0
      %v1279 = vadd.f32 %v1274, %v1118
      %v1280 = vld [vmem:[%s12] sm:$0x1]
      %v1281 = vld [vmem:[%s13] sm:$0x1]
      %v1282 = vsel %vm504, %v1279, 0.0
      %1283 = vadd.xlane.f32.xlu0 %v1282
      %v1284 = vpop.xlane.xlu0 %1283
      %v1285 = vmul.f32 %v1284, %v1094
      %v1286 = vsub.f32 %v1279, %v1285
      %v1287 = vmul.f32 %v1286, %v1286
      %v1288 = vsel %vm504, %v1287, 0.0
      %1289 = vadd.xlane.f32.xlu0 %v1288
      %v1290 = vpop.xlane.xlu0 %1289
      %v1291 = vmul.f32 %v1290, %v1094
      %v1292 = vadd.f32 %v1291, 1e-12
      %v1293 = vrsqrt.pop %v1292
      %v1294 = vmul.f32 %v1286, %v1293
      %v1296 = vlaneseq
      %v1297 = vshrl.u32 %v1296, 7
      %v1298 = vsub.s32 0, %v1297
      %v1299 = vrot.slane %v1280, %v1298
      %v1301 = vmul.f32 %v1294, %v1299
      %v1303 = vlaneseq
      %v1304 = vshrl.u32 %v1303, 7
      %v1305 = vsub.s32 0, %v1304
      %v1306 = vrot.slane %v1281, %v1305
      %v1308 = vadd.f32 %v1301, %v1306
      %1309 = vst.msk [vmem:[%s476] sm:$0xff] %vm504, %v1308
      %p1310 = scmp.lt.s32.totalorder %s25, 1
      %s1311 = scalar_select %p1310, %s25, 1
      %s1312 = smul.addr %s1311, 8
      %s1313 = scalar_lea.vmem %s14, %s1312
      // Predicated region
      $region77: #{bert_forward.4} parent=75 // pred_check
        %p1314 = pneg %p347
      $region78: #{bert_forward.4} parent=75 // pred_check_branch
        %1316 = sbr.rel (%p1314) target = $region80
      $region79: #{bert_forward.4} parent=75 // pred_region
        _
      $region80: #{bert_forward.4} parent=75 // pred_fallthru
        _
    $region76: #{bert_forward.4} parent=5 // pred_fallthru
      _
    %p1317 = scmp.le.s32.totalorder 2, %s20
    // Predicated region
    $region81: #{bert_forward.4} parent=5 // pred_check
      %p1318 = pneg %p1317
    $region82: #{bert_forward.4} parent=5 // pred_check_branch
      %1320 = sbr.rel (%p1318) target = $region84
    $region83: #{bert_forward.4} parent=5 // pred_region
      %s1321 = ssub.s32 %s20, 2
      // Predicated region
      $region85: #{bert_forward.4} parent=83 // pred_check
        %p1322 = pneg %p353
      $region86: #{bert_forward.4} parent=83 // pred_check_branch
        %1324 = sbr.rel (%p1322) target = $region88
      $region87: #{bert_forward.4} parent=83 // pred_region
        %p1325 = scmp.lt.s32.totalorder %s26, 1
        %s1326 = scalar_select %p1325, %s26, 1
        %s1327 = smul.addr %s1326, 8
        %s1328 = scalar_lea.vmem %s14, %s1327
      $region88: #{bert_forward.4} parent=83 // pred_fallthru
        _
    $region84: #{bert_forward.4} parent=5 // pred_fallthru
      _
  $region6: #{bert_forward.4} parent=0 // loop_footer
    %s24 = sadd.s32 1, %s20
  $region7: #{bert_forward.4} parent=0 // loop_footer_branch
    %19 = sbr.rel target = $region3
  $region8: #{bert_forward.4} parent=0 // loop_exit
    _

</llo_original>
